<compile_context>
chip_gen: v7x
topology: tpu7x:2x2x1
jax: 0.10.0
libtpu: 0.0.40
codegen_flags: <defaults>
</compile_context>

<pallas_src>
import math

import jax
import jax.numpy as jnp
from jax import lax
from jax.experimental import pallas as pl
from jax.experimental.pallas import tpu as pltpu

_LANE = 128
_INV_SQRT2 = 1.0 / math.sqrt(2.0)
_TANH_C = math.sqrt(2.0 / math.pi)


def _round_up(x, m):
    return (x + m - 1) // m * m


def _cdiv(a, b):
    return -(-a // b)


def _gelu_f32(x, approximate):
    if approximate:
        # tanh approximation: transcendental lands on the (otherwise idle) EUP
        # slot instead of a long erf polynomial on the VALU.
        return 0.5 * x * (1.0 + jnp.tanh(_TANH_C * (x + 0.044715 * x * x * x)))
    # Exact erf GELU -- matches torch.nn.GELU() default.
    return 0.5 * x * (1.0 + lax.erf(x * _INV_SQRT2))


def _make_fused_kernel(approximate_gelu):
    def kernel(x_ref, w1_ref, b1_ref, w2_ref, b2_ref, o_ref):
        # x_ref:  (tm, C_in)   row tile (native dtype)
        # w1_ref: (C_in, H)    full fc1 weight (resident, single-buffered)
        # b1_ref: (1, H)
        # w2_ref: (H, C_out)   full fc2 weight (resident, single-buffered)
        # b2_ref: (1, C_out)
        # o_ref:  (tm, C_out)
        h = jnp.dot(x_ref[...], w1_ref[...], preferred_element_type=jnp.float32)
        h = _gelu_f32(h + b1_ref[...].astype(jnp.float32), approximate_gelu)
        # dropout(p=0.0) -> identity in forward
        h = h.astype(w2_ref.dtype)
        o = jnp.dot(h, w2_ref[...], preferred_element_type=jnp.float32)
        o_ref[...] = (o + b2_ref[...].astype(jnp.float32)).astype(o_ref.dtype)
        # dropout(p=0.0) -> identity in forward
    return kernel


def _make_chunked_kernel(h_chunk, n_chunks, approximate_gelu):
    # Chunk the hidden dim so the live f32 intermediate is (tm, h_chunk) instead
    # of (tm, H); accumulate fc2 partial products into an f32 VMEM scratch.
    def kernel(x_ref, w1_ref, b1_ref, w2_ref, b2_ref, o_ref, acc_ref):
        acc_ref[...] = jnp.zeros_like(acc_ref)
        x = x_ref[...]

        def body(k, carry):
            off = pl.multiple_of(k * h_chunk, h_chunk)
            h = jnp.dot(x, w1_ref[:, pl.ds(off, h_chunk)],
                        preferred_element_type=jnp.float32)
            h = _gelu_f32(h + b1_ref[:, pl.ds(off, h_chunk)].astype(jnp.float32),
                          approximate_gelu)
            acc_ref[...] += jnp.dot(h.astype(w2_ref.dtype),
                                    w2_ref[pl.ds(off, h_chunk), :],
                                    preferred_element_type=jnp.float32)
            return carry

        lax.fori_loop(0, n_chunks, body, 0)
        o_ref[...] = (acc_ref[...] + b2_ref[...].astype(jnp.float32)).astype(o_ref.dtype)
    return kernel


def _vmem_capacity_bytes():
    try:
        cap = int(pltpu.get_tpu_info().vmem_capacity_bytes)
        if cap > 0:
            return cap
    except Exception:
        pass
    return 64 * 1024 * 1024  # conservative: v7x per-TC VMEM


def mlp_pallas(x, w1, b1, w2, b2, *, tile_m=1024, approximate_gelu=False,
               matmul_dtype=None, force_h_chunk=None, interpret=False):
    """x: (B, N, C_in); w1: (C_in, H); w2: (H, C_out). Returns (B, N, C_out)."""
    orig_dtype = x.dtype
    B, N, C_in = x.shape
    C_in_w, H = w1.shape
    H_w, C_out = w2.shape
    assert C_in_w == C_in and H_w == H
    M = B * N

    x2d = x.reshape(M, C_in)  # contiguous reshape: no extra HBM pass
    if matmul_dtype is not None:
        # One-time cast (e.g. bf16 on v5e) -- accuracy tradeoff, off by default.
        x2d = x2d.astype(matmul_dtype)
        w1 = w1.astype(matmul_dtype)
        w2 = w2.astype(matmul_dtype)

    x_isz = jnp.dtype(x2d.dtype).itemsize
    w_isz = jnp.dtype(w1.dtype).itemsize
    row_align = {4: 8, 2: 16, 1: 32}.get(x_isz, 8)

    # ---- Row tiling: balanced tiles, >=2 grid steps when M allows (v7x dual TC).
    tile_m = max(int(tile_m), row_align)
    n_steps = max(1, _cdiv(M, tile_m))
    if n_steps == 1 and M >= 4 * row_align:
        n_steps = 2
    tm = _round_up(_cdiv(M, n_steps), row_align)
    tm = min(tm, M)  # block equal to the full row dim is always legal

    # ---- Generation-aware VMEM budgeting.
    cap = _vmem_capacity_bytes()
    budget = int(0.8 * cap)

    h_chunk = force_h_chunk
    use_chunked = h_chunk is not None
    if use_chunked:
        h_chunk = _round_up(min(int(h_chunk), H), _LANE)

    def needed_bytes(tm_, chunked, h_eff, weight_buf):
        H_eff = _round_up(H, h_eff) if chunked else H
        wbytes = weight_buf * (C_in * H_eff + H_eff * C_out + H_eff + C_out) * w_isz
        tiles = 2 * tm_ * (C_in + C_out) * x_isz            # double-buffered x / out
        if chunked:
            inter = tm_ * (h_eff + 2 * C_out) * 4           # chunk h + acc + out f32
        else:
            inter = tm_ * (H + C_out) * 4                   # full f32 intermediate
        return wbytes + tiles + inter

    # Prefer the fully fused kernel; fall back to hidden-dim chunking, then to
    # smaller row tiles, when the estimate exceeds the per-core VMEM budget.
    while True:
        if not use_chunked and needed_bytes(tm, False, H, 1) <= budget:
            break
        if use_chunked and needed_bytes(tm, True, h_chunk, 1) <= budget:
            break
        if not use_chunked:
            use_chunked = True
            h_chunk = min(_round_up(H, _LANE), 512)
            continue
        if tm <= row_align:
            break  # smallest sensible config; let the compiler take it from here
        tm = min(M, max(row_align, _round_up(tm // 2, row_align)))

    grid = (pl.cdiv(M, tm),)

    n_chunks = 1
    H_p = H
    if use_chunked:
        H_p = _round_up(H, h_chunk)
        n_chunks = H_p // h_chunk
        if H_p != H:
            # Exact zero-padding: padded hidden cols give GELU(0)=0 and padded
            # W2 rows are 0, so they contribute nothing.
            w1 = jnp.pad(w1, ((0, 0), (0, H_p - H)))
            b1 = jnp.pad(b1, (0, H_p - H))
            w2 = jnp.pad(w2, ((0, H_p - H), (0, 0)))

    b1_2d = b1.reshape(1, H_p)
    b2_2d = b2.reshape(1, C_out)

    def run(single_buffer_weights):
        # Grid-invariant weights: single-buffer (index_map is constant, so
        # double-buffering buys nothing and doubles resident VMEM).
        wkw = {"pipeline_mode": pl.Buffered(1)} if single_buffer_weights else {}
        in_specs = [
            pl.BlockSpec((tm, C_in), lambda i: (i, 0)),        # x row tile
            pl.BlockSpec((C_in, H_p), lambda i: (0, 0), **wkw),  # W1 (resident)
            pl.BlockSpec((1, H_p), lambda i: (0, 0), **wkw),      # b1
            pl.BlockSpec((H_p, C_out), lambda i: (0, 0), **wkw),  # W2 (resident)
            pl.BlockSpec((1, C_out), lambda i: (0, 0), **wkw),    # b2
        ]
        out_specs = pl.BlockSpec((tm, C_out), lambda i: (i, 0))

        if use_chunked:
            kernel = _make_chunked_kernel(h_chunk, n_chunks, approximate_gelu)
            scratch = [pltpu.VMEM((tm, C_out), jnp.float32)]
        else:
            kernel = _make_fused_kernel(approximate_gelu)
            scratch = []

        need = needed_bytes(tm, use_chunked, h_chunk if use_chunked else H,
                            1 if single_buffer_weights else 2)
        vmem_limit = int(min(max(need * 1.3, 32 * 1024 * 1024), 0.9 * cap))

        return pl.pallas_call(
            kernel,
            out_shape=jax.ShapeDtypeStruct((M, C_out), orig_dtype),
            grid_spec=pltpu.PrefetchScalarGridSpec(
                num_scalar_prefetch=0,
                grid=grid,
                in_specs=in_specs,
                out_specs=out_specs,
                scratch_shapes=scratch,
            ),
            compiler_params=pltpu.CompilerParams(
                dimension_semantics=("parallel",),
                vmem_limit_bytes=vmem_limit,
            ),
            interpret=interpret,
        )(x2d, w1, b1_2d, w2, b2_2d)

    try:
        out2d = run(True)
    except Exception:
        # Fallback if the runtime rejects single-buffered (Buffered(1)) inputs.
        out2d = run(False)

    return out2d.reshape(B, N, C_out)


def init_mlp_params(key, in_features, hidden_features, out_features, dtype=jnp.float32):
    """Deterministic init mimicking nn.Linear default (uniform +/- 1/sqrt(fan_in))."""
    k1, k2, k3, k4 = jax.random.split(key, 4)
    lim1 = 1.0 / math.sqrt(in_features)
    lim2 = 1.0 / math.sqrt(hidden_features)
    # Stored as (in, out) = transpose of torch's (out, in) weight.
    w1 = jax.random.uniform(k1, (in_features, hidden_features), dtype, -lim1, lim1)
    b1 = jax.random.uniform(k2, (hidden_features,), dtype, -lim1, lim1)
    w2 = jax.random.uniform(k3, (hidden_features, out_features), dtype, -lim2, lim2)
    b2 = jax.random.uniform(k4, (out_features,), dtype, -lim2, lim2)
    return w1, b1, w2, b2


def mlp_ref(x, w1, b1, w2, b2):
    h = jnp.dot(x.astype(jnp.float32), w1.astype(jnp.float32)) + b1.astype(jnp.float32)
    h = _gelu_f32(h, approximate=False)
    return jnp.dot(h, w2.astype(jnp.float32)) + b2.astype(jnp.float32)


if __name__ == "__main__":
    key = jax.random.PRNGKey(0)
    kx, kp, kx2 = jax.random.split(key, 3)

    # Small Swin-like shapes: (num_windows*B, tokens_per_window, C), mlp_ratio=4.
    B, N = 2, 64
    in_features, hidden_features, out_features = 96, 384, 96

    x = jax.random.normal(kx, (B, N, in_features), jnp.float32)
    w1, b1, w2, b2 = init_mlp_params(kp, in_features, hidden_features, out_features)
    ref = mlp_ref(x, w1, b1, w2, b2)

    # 1) f32, fused path.
    out = jax.block_until_ready(mlp_pallas(x, w1, b1, w2, b2))
    assert out.shape == (B, N, out_features)
    assert jnp.allclose(out, ref, atol=5e-3, rtol=5e-3), "f32 fused mismatch vs reference"

    # 2) Forced hidden-dim chunked path (large-layer / v7x VMEM fallback).
    out_ck = jax.block_until_ready(mlp_pallas(x, w1, b1, w2, b2, force_h_chunk=128))
    assert jnp.allclose(out_ck, ref, atol=5e-3, rtol=5e-3), "chunked mismatch vs reference"

    # 3) Ragged row count (partial last row tile, no wrapper-side padding).
    xr = jax.random.normal(kx2, (3, 50, in_features), jnp.float32)
    ref_r = mlp_ref(xr, w1, b1, w2, b2)
    out_r = jax.block_until_ready(mlp_pallas(xr, w1, b1, w2, b2, tile_m=64))
    assert out_r.shape == (3, 50, out_features)
    assert jnp.allclose(out_r, ref_r, atol=5e-3, rtol=5e-3), "ragged mismatch vs reference"

    # 4) bf16 path (native MXU dtype, f32 accumulation) -- looser tolerance.
    out_bf16 = jax.block_until_ready(mlp_pallas(
        x.astype(jnp.bfloat16),
        w1.astype(jnp.bfloat16), b1.astype(jnp.bfloat16),
        w2.astype(jnp.bfloat16), b2.astype(jnp.bfloat16)))
    err = jnp.max(jnp.abs(out_bf16.astype(jnp.float32) - ref))
    scale = jnp.max(jnp.abs(ref)) + 1e-6
    assert err / scale < 5e-2, "bf16 mismatch vs reference"

    # 5) tanh-approximate GELU (EUP-friendly) behind its flag -- looser tolerance.
    out_ap = jax.block_until_ready(mlp_pallas(x, w1, b1, w2, b2, approximate_gelu=True))
    assert jnp.max(jnp.abs(out_ap - ref)) < 5e-2, "approx-gelu mismatch vs reference"

    print("KERNEL_OK")
</pallas_src>

<mosaic_0001>
module attributes {stable_mosaic.version = 11 : i64} {
  func.func @kernel(%arg0: i32, %arg1: memref<64x96xf32, #tpu.memory_space<vmem>>, %arg2: memref<96x384xf32, #tpu.memory_space<vmem>>, %arg3: memref<1x384xf32, #tpu.memory_space<vmem>>, %arg4: memref<384x96xf32, #tpu.memory_space<vmem>>, %arg5: memref<1x96xf32, #tpu.memory_space<vmem>>, %arg6: memref<64x96xf32, #tpu.memory_space<vmem>>) attributes {dimension_semantics = [#tpu.dimension_semantics<parallel>], iteration_bounds = array<i64: 2>, scalar_prefetch = 0 : i64, scratch_operands = 0 : i64, tpu.core_type = #tpu.core_type<tc>, window_params = [{transform_indices = @transform_0, window_bounds = array<i64: 64, 96>}, {pipeline_mode = #tpu.pipeline_mode<synchronous>, transform_indices = @transform_1, window_bounds = array<i64: 96, 384>}, {pipeline_mode = #tpu.pipeline_mode<synchronous>, transform_indices = @transform_2, window_bounds = array<i64: 1, 384>}, {pipeline_mode = #tpu.pipeline_mode<synchronous>, transform_indices = @transform_3, window_bounds = array<i64: 384, 96>}, {pipeline_mode = #tpu.pipeline_mode<synchronous>, transform_indices = @transform_4, window_bounds = array<i64: 1, 96>}, {transform_indices = @transform_5, window_bounds = array<i64: 64, 96>}]} {
    %c0 = arith.constant 0 : index
    %c0_0 = arith.constant 0 : index
    %0 = vector.load %arg1[%c0, %c0_0] : memref<64x96xf32, #tpu.memory_space<vmem>>, vector<64x96xf32>
    %c0_1 = arith.constant 0 : index
    %c0_2 = arith.constant 0 : index
    %1 = vector.load %arg2[%c0_1, %c0_2] : memref<96x384xf32, #tpu.memory_space<vmem>>, vector<96x384xf32>
    %cst = arith.constant dense<0.000000e+00> : vector<64x384xf32>
    %2 = tpu.matmul %0, %1, %cst {dimension_numbers = #tpu.dot_dimension_numbers<[1], [0], [0], [1], [0, 0, 1, 1], [], []>} : vector<64x96xf32>, vector<96x384xf32>, vector<64x384xf32> -> vector<64x384xf32>
    %c0_3 = arith.constant 0 : index
    %c0_4 = arith.constant 0 : index
    %3 = vector.load %arg3[%c0_3, %c0_4] : memref<1x384xf32, #tpu.memory_space<vmem>>, vector<1x384xf32>
    %4 = vector.broadcast %3 : vector<1x384xf32> to vector<64x384xf32>
    %5 = arith.addf %2, %4 : vector<64x384xf32>
    %cst_5 = arith.constant 5.000000e-01 : f32
    %6 = vector.broadcast %cst_5 : f32 to vector<64x384xf32>
    %7 = arith.mulf %6, %5 : vector<64x384xf32>
    %cst_6 = arith.constant 0.707106769 : f32
    %8 = vector.broadcast %cst_6 : f32 to vector<64x384xf32>
    %9 = arith.mulf %5, %8 : vector<64x384xf32>
    %10 = math.erf %9 : vector<64x384xf32>
    %cst_7 = arith.constant 1.000000e+00 : f32
    %11 = vector.broadcast %cst_7 : f32 to vector<64x384xf32>
    %12 = arith.addf %11, %10 : vector<64x384xf32>
    %13 = arith.mulf %7, %12 : vector<64x384xf32>
    %c0_8 = arith.constant 0 : index
    %c0_9 = arith.constant 0 : index
    %14 = vector.load %arg4[%c0_8, %c0_9] : memref<384x96xf32, #tpu.memory_space<vmem>>, vector<384x96xf32>
    %cst_10 = arith.constant dense<0.000000e+00> : vector<64x96xf32>
    %15 = tpu.matmul %13, %14, %cst_10 {dimension_numbers = #tpu.dot_dimension_numbers<[1], [0], [0], [1], [0, 0, 1, 1], [], []>} : vector<64x384xf32>, vector<384x96xf32>, vector<64x96xf32> -> vector<64x96xf32>
    %c0_11 = arith.constant 0 : index
    %c0_12 = arith.constant 0 : index
    %16 = vector.load %arg5[%c0_11, %c0_12] : memref<1x96xf32, #tpu.memory_space<vmem>>, vector<1x96xf32>
    %17 = vector.broadcast %16 : vector<1x96xf32> to vector<64x96xf32>
    %18 = arith.addf %15, %17 : vector<64x96xf32>
    %c0_13 = arith.constant 0 : index
    %c0_14 = arith.constant 0 : index
    %19 = vector.load %arg6[%c0_13, %c0_14] : memref<64x96xf32, #tpu.memory_space<vmem>>, vector<64x96xf32>
    tpu.vector_store %arg6[%c0_13, %c0_14], %18 {strides = array<i32>} : memref<64x96xf32, #tpu.memory_space<vmem>>, vector<64x96xf32>,
    return
  }
  func.func @transform_0(%arg0: i32) -> (i32, i32) {
    %c0_i32 = arith.constant 0 : i32
    %c0_i32_0 = arith.constant 0 : i32
    return %arg0, %c0_i32 : i32, i32
  }
  func.func @transform_1(%arg0: i32) -> (i32, i32) {
    %c0_i32 = arith.constant 0 : i32
    %c0_i32_0 = arith.constant 0 : i32
    %c0_i32_1 = arith.constant 0 : i32
    return %c0_i32, %c0_i32_0 : i32, i32
  }
  func.func @transform_2(%arg0: i32) -> (i32, i32) {
    %c0_i32 = arith.constant 0 : i32
    %c0_i32_0 = arith.constant 0 : i32
    %c0_i32_1 = arith.constant 0 : i32
    return %c0_i32, %c0_i32_0 : i32, i32
  }
  func.func @transform_3(%arg0: i32) -> (i32, i32) {
    %c0_i32 = arith.constant 0 : i32
    %c0_i32_0 = arith.constant 0 : i32
    %c0_i32_1 = arith.constant 0 : i32
    return %c0_i32, %c0_i32_0 : i32, i32
  }
  func.func @transform_4(%arg0: i32) -> (i32, i32) {
    %c0_i32 = arith.constant 0 : i32
    %c0_i32_0 = arith.constant 0 : i32
    %c0_i32_1 = arith.constant 0 : i32
    return %c0_i32, %c0_i32_0 : i32, i32
  }
  func.func @transform_5(%arg0: i32) -> (i32, i32) {
    %c0_i32 = arith.constant 0 : i32
    %c0_i32_0 = arith.constant 0 : i32
    return %arg0, %c0_i32 : i32, i32
  }
}

module attributes {stable_mosaic.version = 11 : i64} {
  func.func @kernel(%arg0: i32, %arg1: memref<64x96xf32, #tpu.memory_space<vmem>>, %arg2: memref<96x384xf32, #tpu.memory_space<vmem>>, %arg3: memref<1x384xf32, #tpu.memory_space<vmem>>, %arg4: memref<384x96xf32, #tpu.memory_space<vmem>>, %arg5: memref<1x96xf32, #tpu.memory_space<vmem>>, %arg6: memref<64x96xf32, #tpu.memory_space<vmem>>) attributes {dimension_semantics = [#tpu.dimension_semantics<parallel>], iteration_bounds = array<i64: 2>, scalar_prefetch = 0 : i64, scratch_operands = 0 : i64, tpu.core_type = #tpu.core_type<tc>, window_params = [{transform_indices = @transform_0, window_bounds = array<i64: 64, 96>}, {pipeline_mode = #tpu.pipeline_mode<synchronous>, transform_indices = @transform_1, window_bounds = array<i64: 96, 384>}, {pipeline_mode = #tpu.pipeline_mode<synchronous>, transform_indices = @transform_2, window_bounds = array<i64: 1, 384>}, {pipeline_mode = #tpu.pipeline_mode<synchronous>, transform_indices = @transform_3, window_bounds = array<i64: 384, 96>}, {pipeline_mode = #tpu.pipeline_mode<synchronous>, transform_indices = @transform_4, window_bounds = array<i64: 1, 96>}, {transform_indices = @transform_5, window_bounds = array<i64: 64, 96>}]} {
    %c0 = arith.constant 0 : index
    %c0_0 = arith.constant 0 : index
    %0 = vector.load %arg1[%c0, %c0_0] : memref<64x96xf32, #tpu.memory_space<vmem>>, vector<64x96xf32>
    %c0_1 = arith.constant 0 : index
    %c0_2 = arith.constant 0 : index
    %1 = vector.load %arg2[%c0_1, %c0_2] : memref<96x384xf32, #tpu.memory_space<vmem>>, vector<96x384xf32>
    %cst = arith.constant dense<0.000000e+00> : vector<64x384xf32>
    %2 = tpu.matmul %0, %1, %cst {dimension_numbers = #tpu.dot_dimension_numbers<[1], [0], [0], [1], [0, 0, 1, 1], [], []>} : vector<64x96xf32>, vector<96x384xf32>, vector<64x384xf32> -> vector<64x384xf32>
    %c0_3 = arith.constant 0 : index
    %c0_4 = arith.constant 0 : index
    %3 = vector.load %arg3[%c0_3, %c0_4] : memref<1x384xf32, #tpu.memory_space<vmem>>, vector<1x384xf32>
    %4 = vector.broadcast %3 : vector<1x384xf32> to vector<64x384xf32>
    %5 = arith.addf %2, %4 : vector<64x384xf32>
    %cst_5 = arith.constant 5.000000e-01 : f32
    %6 = vector.broadcast %cst_5 : f32 to vector<64x384xf32>
    %7 = arith.mulf %6, %5 : vector<64x384xf32>
    %cst_6 = arith.constant 0.707106769 : f32
    %8 = vector.broadcast %cst_6 : f32 to vector<64x384xf32>
    %9 = arith.mulf %5, %8 : vector<64x384xf32>
    %10 = math.erf %9 : vector<64x384xf32>
    %cst_7 = arith.constant 1.000000e+00 : f32
    %11 = vector.broadcast %cst_7 : f32 to vector<64x384xf32>
    %12 = arith.addf %11, %10 : vector<64x384xf32>
    %13 = arith.mulf %7, %12 : vector<64x384xf32>
    %c0_8 = arith.constant 0 : index
    %c0_9 = arith.constant 0 : index
    %14 = vector.load %arg4[%c0_8, %c0_9] : memref<384x96xf32, #tpu.memory_space<vmem>>, vector<384x96xf32>
    %cst_10 = arith.constant dense<0.000000e+00> : vector<64x96xf32>
    %15 = tpu.matmul %13, %14, %cst_10 {dimension_numbers = #tpu.dot_dimension_numbers<[1], [0], [0], [1], [0, 0, 1, 1], [], []>} : vector<64x384xf32>, vector<384x96xf32>, vector<64x96xf32> -> vector<64x96xf32>
    %c0_11 = arith.constant 0 : index
    %c0_12 = arith.constant 0 : index
    %16 = vector.load %arg5[%c0_11, %c0_12] : memref<1x96xf32, #tpu.memory_space<vmem>>, vector<1x96xf32>
    %17 = vector.broadcast %16 : vector<1x96xf32> to vector<64x96xf32>
    %18 = arith.addf %15, %17 : vector<64x96xf32>
    %c0_13 = arith.constant 0 : index
    %c0_14 = arith.constant 0 : index
    %19 = vector.load %arg6[%c0_13, %c0_14] : memref<64x96xf32, #tpu.memory_space<vmem>>, vector<64x96xf32>
    tpu.vector_store %arg6[%c0_13, %c0_14], %18 {strides = array<i32>} : memref<64x96xf32, #tpu.memory_space<vmem>>, vector<64x96xf32>,
    return
  }
  func.func @transform_0(%arg0: i32) -> (i32, i32) {
    %c0_i32 = arith.constant 0 : i32
    %c0_i32_0 = arith.constant 0 : i32
    return %arg0, %c0_i32 : i32, i32
  }
  func.func @transform_1(%arg0: i32) -> (i32, i32) {
    %c0_i32 = arith.constant 0 : i32
    %c0_i32_0 = arith.constant 0 : i32
    %c0_i32_1 = arith.constant 0 : i32
    return %c0_i32, %c0_i32_0 : i32, i32
  }
  func.func @transform_2(%arg0: i32) -> (i32, i32) {
    %c0_i32 = arith.constant 0 : i32
    %c0_i32_0 = arith.constant 0 : i32
    %c0_i32_1 = arith.constant 0 : i32
    return %c0_i32, %c0_i32_0 : i32, i32
  }
  func.func @transform_3(%arg0: i32) -> (i32, i32) {
    %c0_i32 = arith.constant 0 : i32
    %c0_i32_0 = arith.constant 0 : i32
    %c0_i32_1 = arith.constant 0 : i32
    return %c0_i32, %c0_i32_0 : i32, i32
  }
  func.func @transform_4(%arg0: i32) -> (i32, i32) {
    %c0_i32 = arith.constant 0 : i32
    %c0_i32_0 = arith.constant 0 : i32
    %c0_i32_1 = arith.constant 0 : i32
    return %c0_i32, %c0_i32_0 : i32, i32
  }
  func.func @transform_5(%arg0: i32) -> (i32, i32) {
    %c0_i32 = arith.constant 0 : i32
    %c0_i32_0 = arith.constant 0 : i32
    return %arg0, %c0_i32 : i32, i32
  }
}

</mosaic_0001>

<llo_original>
// kernel: tpu_custom_call.1
$region0: #{tpu_custom_call.1}
  #allocation0 [shape = 'u32[]', space=smem, size = 0x4, offset = 0x4, fixed_abs, tag = 'smem constant byte address 0x4 - core index']
  #allocation1 [shape = 'u32[144,128]{1,0:T(1,128)}', space=vmem, size = 0x12000, scoped, tag = 'internal scratch']
  %s0 = inlined_call_operand.vmem [shape: f32[128,96], index: 0, kind: input, shape index: {}]
  %s1 = inlined_call_operand.vmem [shape: f32[96,384], index: 1, kind: input, shape index: {}]
  %s2 = inlined_call_operand.vmem [shape: f32[1,384], index: 2, kind: input, shape index: {}]
  %s3 = inlined_call_operand.vmem [shape: f32[384,96], index: 3, kind: input, shape index: {}]
  %s4 = inlined_call_operand.vmem [shape: f32[1,96], index: 4, kind: input, shape index: {}]
  %s5 = inlined_call_operand.vmem [shape: f32[128,96], index: 5, kind: output, shape index: {}]
  %s6 = sld [smem:[#allocation0]]
  $region53: #{tpu_custom_call.1} parent=0
    _
  %s8 = ssub.s32 1, %s6
  %s9 = scalar_select 0, %s8, %s6
  loop: start=0, step=1, limit=4
  $region2: #{tpu_custom_call.1} parent=0 // loop_pre_header
    _
  $region3: #{tpu_custom_call.1} parent=0 // loop_header
    %s11 = sphi 0, %s15
    %p12 = scmp.ge.s32.totalorder %s11, 4
    %s21 = sphi 0, %s23
    %s24 = sphi 0, %s21
    %s25 = sphi 0, %s24
    %s41 = sphi 0, %s25
    %s45 = sphi 0, %s45
    %s47 = sphi 0, %s45
    %s48 = sphi 0, %s47
    %s62 = sphi 0, %s48
    %s66 = sphi 0, %s66
    %s68 = sphi 0, %s66
    %s69 = sphi 0, %s68
    %s83 = sphi 0, %s69
    %s87 = sphi 0, %s87
    %s89 = sphi 0, %s87
    %s90 = sphi 0, %s89
    %s104 = sphi 0, %s90
    %s108 = sphi 0, %s108
    %s110 = sphi 0, %s108
    %s111 = sphi 0, %s110
    %s125 = sphi 0, %s111
    %s131 = sphi 0, %s133
    %s134 = sphi 0, %s131
    %s135 = sphi 0, %s134
    %s151 = sphi 0, %s135
  $region4: #{tpu_custom_call.1} parent=0 // loop_header_branch
    %14 = sbr.rel (%p12) target = $region8
  $region5: #{tpu_custom_call.1} parent=0 // loop_body
    %s16 = ssub.s32 %s11, 1
    %s17 = ssub.s32 %s11, 2
    %s18 = sadd.s32 %s11, 1
    %s19 = ssub.s32 %s11, %s18
    %p20 = scmp.eq.s32.totalorder %s19, 0
    %s22 = sadd.s32 %s21, 1
    %s23 = scalar_select %p20, %s21, %s22
    %p26 = pneg %p20
    %p27 = scmp.eq.s32.totalorder %s11, 1
    %p28 = por %p26, %p27
    %p29 = scmp.ne.s32.totalorder %s21, %s24
    %p30 = scmp.eq.s32.totalorder %s11, 0
    %p31 = por %p29, %p30
    %p32 = scmp.ne.s32.totalorder %s21, %s24
    %p33 = scmp.eq.s32.totalorder %s16, 1
    %p34 = por %p32, %p33
    %p35 = scmp.ne.s32.totalorder %s24, %s25
    %p36 = scmp.eq.s32.totalorder %s16, 0
    %p37 = por %p35, %p36
    %p38 = scmp.ne.s32.totalorder %s24, %s25
    %p39 = scmp.eq.s32.totalorder %s17, 1
    %p40 = por %p38, %p39
    %p42 = scmp.ne.s32.totalorder %s25, %s41
    %p43 = scmp.eq.s32.totalorder %s17, 0
    %p44 = por %p42, %p43
    %s46 = sadd.s32 %s45, 1
    %p49 = scmp.eq.s32.totalorder %s11, 1
    %p50 = scmp.ne.s32.totalorder %s45, %s47
    %p51 = scmp.eq.s32.totalorder %s11, 0
    %p52 = por %p50, %p51
    %p53 = scmp.ne.s32.totalorder %s45, %s47
    %p54 = scmp.eq.s32.totalorder %s16, 1
    %p55 = por %p53, %p54
    %p56 = scmp.ne.s32.totalorder %s47, %s48
    %p57 = scmp.eq.s32.totalorder %s16, 0
    %p58 = por %p56, %p57
    %p59 = scmp.ne.s32.totalorder %s47, %s48
    %p60 = scmp.eq.s32.totalorder %s17, 1
    %p61 = por %p59, %p60
    %p63 = scmp.ne.s32.totalorder %s48, %s62
    %p64 = scmp.eq.s32.totalorder %s17, 0
    %p65 = por %p63, %p64
    %s67 = sadd.s32 %s66, 1
    %p70 = scmp.eq.s32.totalorder %s11, 1
    %p71 = scmp.ne.s32.totalorder %s66, %s68
    %p72 = scmp.eq.s32.totalorder %s11, 0
    %p73 = por %p71, %p72
    %p74 = scmp.ne.s32.totalorder %s66, %s68
    %p75 = scmp.eq.s32.totalorder %s16, 1
    %p76 = por %p74, %p75
    %p77 = scmp.ne.s32.totalorder %s68, %s69
    %p78 = scmp.eq.s32.totalorder %s16, 0
    %p79 = por %p77, %p78
    %p80 = scmp.ne.s32.totalorder %s68, %s69
    %p81 = scmp.eq.s32.totalorder %s17, 1
    %p82 = por %p80, %p81
    %p84 = scmp.ne.s32.totalorder %s69, %s83
    %p85 = scmp.eq.s32.totalorder %s17, 0
    %p86 = por %p84, %p85
    %s88 = sadd.s32 %s87, 1
    %p91 = scmp.eq.s32.totalorder %s11, 1
    %p92 = scmp.ne.s32.totalorder %s87, %s89
    %p93 = scmp.eq.s32.totalorder %s11, 0
    %p94 = por %p92, %p93
    %p95 = scmp.ne.s32.totalorder %s87, %s89
    %p96 = scmp.eq.s32.totalorder %s16, 1
    %p97 = por %p95, %p96
    %p98 = scmp.ne.s32.totalorder %s89, %s90
    %p99 = scmp.eq.s32.totalorder %s16, 0
    %p100 = por %p98, %p99
    %p101 = scmp.ne.s32.totalorder %s89, %s90
    %p102 = scmp.eq.s32.totalorder %s17, 1
    %p103 = por %p101, %p102
    %p105 = scmp.ne.s32.totalorder %s90, %s104
    %p106 = scmp.eq.s32.totalorder %s17, 0
    %p107 = por %p105, %p106
    %s109 = sadd.s32 %s108, 1
    %p112 = scmp.eq.s32.totalorder %s11, 1
    %p113 = scmp.ne.s32.totalorder %s108, %s110
    %p114 = scmp.eq.s32.totalorder %s11, 0
    %p115 = por %p113, %p114
    %p116 = scmp.ne.s32.totalorder %s108, %s110
    %p117 = scmp.eq.s32.totalorder %s16, 1
    %p118 = por %p116, %p117
    %p119 = scmp.ne.s32.totalorder %s110, %s111
    %p120 = scmp.eq.s32.totalorder %s16, 0
    %p121 = por %p119, %p120
    %p122 = scmp.ne.s32.totalorder %s110, %s111
    %p123 = scmp.eq.s32.totalorder %s17, 1
    %p124 = por %p122, %p123
    %p126 = scmp.ne.s32.totalorder %s111, %s125
    %p127 = scmp.eq.s32.totalorder %s17, 0
    %p128 = por %p126, %p127
    %s129 = ssub.s32 %s11, %s18
    %p130 = scmp.eq.s32.totalorder %s129, 0
    %s132 = sadd.s32 %s131, 1
    %s133 = scalar_select %p130, %s131, %s132
    %p136 = pneg %p130
    %p137 = scmp.eq.s32.totalorder %s11, 1
    %p138 = por %p136, %p137
    %p139 = scmp.ne.s32.totalorder %s131, %s134
    %p140 = scmp.eq.s32.totalorder %s11, 0
    %p141 = por %p139, %p140
    %p142 = scmp.ne.s32.totalorder %s131, %s134
    %p143 = scmp.eq.s32.totalorder %s16, 1
    %p144 = por %p142, %p143
    %p145 = scmp.ne.s32.totalorder %s134, %s135
    %p146 = scmp.eq.s32.totalorder %s16, 0
    %p147 = por %p145, %p146
    %p148 = scmp.ne.s32.totalorder %s134, %s135
    %p149 = scmp.eq.s32.totalorder %s17, 1
    %p150 = por %p148, %p149
    %p152 = scmp.ne.s32.totalorder %s135, %s151
    %p153 = scmp.eq.s32.totalorder %s17, 0
    %p154 = por %p152, %p153
    %p155 = scmp.le.s32.totalorder 1, %s11
    %p156 = scmp.lt.s32.totalorder %s11, 3
    %p157 = pnand %p155, %p156
    %p158 = pneg %p157
    // Predicated region
    $region9: #{tpu_custom_call.1} parent=5 // pred_check
      _
    $region10: #{tpu_custom_call.1} parent=5 // pred_check_branch
      %160 = sbr.rel (%p157) target = $region12
    $region11: #{tpu_custom_call.1} parent=5 // pred_region
      %s161 = ssub.s32 %s11, 1
      // Predicated region
      $region13: #{tpu_custom_call.1} parent=11 // pred_check
        %p162 = pneg %p58
      $region14: #{tpu_custom_call.1} parent=11 // pred_check_branch
        %164 = sbr.rel (%p162) target = $region16
      $region15: #{tpu_custom_call.1} parent=11 // pred_region
        _
      $region16: #{tpu_custom_call.1} parent=11 // pred_fallthru
        _
      // Predicated region
      $region17: #{tpu_custom_call.1} parent=11 // pred_check
        %p165 = pneg %p79
      $region18: #{tpu_custom_call.1} parent=11 // pred_check_branch
        %167 = sbr.rel (%p165) target = $region20
      $region19: #{tpu_custom_call.1} parent=11 // pred_region
        _
      $region20: #{tpu_custom_call.1} parent=11 // pred_fallthru
        _
      // Predicated region
      $region21: #{tpu_custom_call.1} parent=11 // pred_check
        %p168 = pneg %p100
      $region22: #{tpu_custom_call.1} parent=11 // pred_check_branch
        %170 = sbr.rel (%p168) target = $region24
      $region23: #{tpu_custom_call.1} parent=11 // pred_region
        _
      $region24: #{tpu_custom_call.1} parent=11 // pred_fallthru
        _
      // Predicated region
      $region25: #{tpu_custom_call.1} parent=11 // pred_check
        %p171 = pneg %p121
      $region26: #{tpu_custom_call.1} parent=11 // pred_check_branch
        %173 = sbr.rel (%p171) target = $region28
      $region27: #{tpu_custom_call.1} parent=11 // pred_region
        _
      $region28: #{tpu_custom_call.1} parent=11 // pred_fallthru
        _
    $region12: #{tpu_custom_call.1} parent=5 // pred_fallthru
      _
    %p174 = scmp.lt.s32.totalorder %s11, 2
    // Predicated region
    $region29: #{tpu_custom_call.1} parent=5 // pred_check
      %p175 = pneg %p174
    $region30: #{tpu_custom_call.1} parent=5 // pred_check_branch
      %177 = sbr.rel (%p175) target = $region32
    $region31: #{tpu_custom_call.1} parent=5 // pred_region
      // Predicated region
      $region33: #{tpu_custom_call.1} parent=31 // pred_check
        %p178 = pneg %p31
      $region34: #{tpu_custom_call.1} parent=31 // pred_check_branch
        %180 = sbr.rel (%p178) target = $region36
      $region35: #{tpu_custom_call.1} parent=31 // pred_region
        %s181 = smul.u32 8, %s11
        %p182 = scmp.lt.s32.totalorder %s181, 15
        %s183 = scalar_select %p182, %s181, 15
        %s184 = smul.addr %s183, 8
        %s185 = scalar_lea.vmem %s0, %s184
        %s186 = smul.u32 8, %s11
      $region36: #{tpu_custom_call.1} parent=31 // pred_fallthru
        _
    $region32: #{tpu_custom_call.1} parent=5 // pred_fallthru
      _
    %p187 = scmp.le.s32.totalorder 1, %s11
    %p188 = scmp.lt.s32.totalorder %s11, 3
    %p189 = pnand %p187, %p188
    %p190 = pneg %p189
    // Predicated region
    $region37: #{tpu_custom_call.1} parent=5 // pred_check
      _
    $region38: #{tpu_custom_call.1} parent=5 // pred_check_branch
      %192 = sbr.rel (%p189) target = $region40
    $region39: #{tpu_custom_call.1} parent=5 // pred_region
      %s193 = ssub.s32 %s11, 1
      %s194 = smul.u32 8, %s16
      %p195 = scmp.lt.s32.totalorder %s194, 15
      %s196 = scalar_select %p195, %s194, 15
      %s197 = smul.addr %s196, 8
      %s198 = scalar_lea.vmem %s0, %s197
      %p199 = pneg %p37
      %p200 = pneg %p34
      %p201 = pneg %p58
      %p202 = pneg %p55
      %p203 = pneg %p79
      %p204 = pneg %p76
      %p205 = pneg %p100
      %p206 = pneg %p97
      %p207 = pneg %p121
      %p208 = pneg %p118
      %p209 = pneg %p147
      %p210 = pneg %p144
      %s211 = smul.u32 8, %s16
      %p212 = scmp.lt.s32.totalorder %s211, 15
      %s213 = scalar_select %p212, %s211, 15
      %s214 = smul.addr %s213, 8
      %s215 = scalar_lea.vmem %s5, %s214
      %s216 = smul.u32 8, %s16
      %p217 = scmp.lt.s32.totalorder %s216, 15
      %s218 = scalar_select %p217, %s216, 15
      %s219 = smul.addr %s218, 8
      %s220 = scalar_lea.vmem %s0, %s219
      %s221 = smul.u32 8, %s16
      %s222 = smul.u32 8, %s16
      %p223 = scmp.lt.s32.totalorder %s222, 15
      %s224 = scalar_select %p223, %s222, 15
      %s225 = smul.addr %s224, 8
      %s226 = scalar_lea.vmem %s5, %s225
      %s227 = smul.u32 8, %s16
      %v228 = vld [vmem:[%s220] sm:$0xff]
      %v229 = vld [vmem:[%s220 + $0x8] sm:$0xff]
      %v230 = vld [vmem:[%s220 + $0x10] sm:$0xff]
      %v231 = vld [vmem:[%s220 + $0x18] sm:$0xff]
      %v232 = vld [vmem:[%s220 + $0x20] sm:$0xff]
      %v233 = vld [vmem:[%s220 + $0x28] sm:$0xff]
      %v234 = vld [vmem:[%s220 + $0x30] sm:$0xff]
      %v235 = vld [vmem:[%s220 + $0x38] sm:$0xff]
      %v236 = vld [vmem:[%s1] sm:$0xff]
      %v237 = vld [vmem:[%s1 + $0x8] sm:$0xff]
      %v238 = vld [vmem:[%s1 + $0x10] sm:$0xff]
      %v239 = vld [vmem:[%s1 + $0x18] sm:$0xff]
      %v240 = vld [vmem:[%s1 + $0x20] sm:$0xff]
      %v241 = vld [vmem:[%s1 + $0x28] sm:$0xff]
      %v242 = vld [vmem:[%s1 + $0x30] sm:$0xff]
      %v243 = vld [vmem:[%s1 + $0x38] sm:$0xff]
      %v244 = vld [vmem:[%s1 + $0x40] sm:$0xff]
      %v245 = vld [vmem:[%s1 + $0x48] sm:$0xff]
      %v246 = vld [vmem:[%s1 + $0x50] sm:$0xff]
      %v247 = vld [vmem:[%s1 + $0x58] sm:$0xff]
      %v248 = vld [vmem:[%s1 + $0x60] sm:$0xff]
      %v249 = vld [vmem:[%s1 + $0x68] sm:$0xff]
      %v250 = vld [vmem:[%s1 + $0x70] sm:$0xff]
      %v251 = vld [vmem:[%s1 + $0x78] sm:$0xff]
      %v252 = vld [vmem:[%s1 + $0x80] sm:$0xff]
      %v253 = vld [vmem:[%s1 + $0x88] sm:$0xff]
      %v254 = vld [vmem:[%s1 + $0x90] sm:$0xff]
      %v255 = vld [vmem:[%s1 + $0x98] sm:$0xff]
      %v256 = vld [vmem:[%s1 + $0xa0] sm:$0xff]
      %v257 = vld [vmem:[%s1 + $0xa8] sm:$0xff]
      %v258 = vld [vmem:[%s1 + $0xb0] sm:$0xff]
      %v259 = vld [vmem:[%s1 + $0xb8] sm:$0xff]
      %v260 = vld [vmem:[%s1 + $0xc0] sm:$0xff]
      %v261 = vld [vmem:[%s1 + $0xc8] sm:$0xff]
      %v262 = vld [vmem:[%s1 + $0xd0] sm:$0xff]
      %v263 = vld [vmem:[%s1 + $0xd8] sm:$0xff]
      %v264 = vld [vmem:[%s1 + $0xe0] sm:$0xff]
      %v265 = vld [vmem:[%s1 + $0xe8] sm:$0xff]
      %v266 = vld [vmem:[%s1 + $0xf0] sm:$0xff]
      %v267 = vld [vmem:[%s1 + $0xf8] sm:$0xff]
      %v268 = vld [vmem:[%s1 + $0x100] sm:$0xff]
      %v269 = vld [vmem:[%s1 + $0x108] sm:$0xff]
      %v270 = vld [vmem:[%s1 + $0x110] sm:$0xff]
      %v271 = vld [vmem:[%s1 + $0x118] sm:$0xff]
      %v272 = vld [vmem:[%s2] sm:$0x7]
      %v274 = vlaneseq
      %v275 = vshrl.u32 %v274, 7
      %v276 = vsub.s32 0, %v275
      %v277 = vrot.slane %v272, %v276
      %v278 = vlaneseq
      %v279 = vshrl.u32 %v278, 7
      %v280 = vsub.s32 1, %v279
      %v281 = vrot.slane %v272, %v280
      %v282 = vlaneseq
      %v283 = vshrl.u32 %v282, 7
      %v284 = vsub.s32 2, %v283
      %v285 = vrot.slane %v272, %v284
      %vm289 = vcmask 785408
      %v291 = vsel %vm289, %v228, 0
      %v294 = vsel %vm289, %v229, 0
      %v297 = vsel %vm289, %v230, 0
      %v300 = vsel %vm289, %v231, 0
      %v303 = vsel %vm289, %v232, 0
      %v306 = vsel %vm289, %v233, 0
      %v309 = vsel %vm289, %v234, 0
      %v312 = vsel %vm289, %v235, 0
      %314 = vmatprep.subr.mxu0 %v237
      %315 = vmatpush1.msra.mxu0 %v236
      %316 = vmatprep.subr.mxu0 %v240
      %317 = vmatpush1.msra.mxu0 %v239
      %318 = vmatprep.subr.mxu0 %v243
      %319 = vmatpush1.msra.mxu0 %v242
      %320 = vmatprep.subr.mxu0 %v246
      %321 = vmatpush1.msra.mxu0 %v245
      %322 = vmatprep.subr.mxu0 %v249
      %323 = vmatpush1.msra.mxu0 %v248
      %324 = vmatprep.subr.mxu0 %v252
      %325 = vmatpush1.msra.mxu0 %v251
      %326 = vmatprep.subr.mxu0 %v255
      %327 = vmatpush1.msra.mxu0 %v254
      %328 = vmatprep.subr.mxu0 %v258
      %329 = vmatpush1.msra.mxu0 %v257
      %330 = vmatprep.subr.mxu0 %v261
      %331 = vmatpush1.msra.mxu0 %v260
      %332 = vmatprep.subr.mxu0 %v264
      %333 = vmatpush1.msra.mxu0 %v263
      %334 = vmatprep.subr.mxu0 %v267
      %335 = vmatpush1.msra.mxu0 %v266
      %336 = vmatprep.subr.mxu0 %v270
      %337 = vmatpush1.msra.mxu0 %v269
      %338 = vmatprep.subr.mxu0 0.0
      %339 = vmatpush1.msra.mxu0 0.0
      %340 = vmatprep.subr.mxu0 0.0
      %341 = vmatpush1.msra.mxu0 0.0
      %342 = vmatprep.subr.mxu0 0.0
      %343 = vmatpush1.msra.mxu0 0.0
      %344 = vmatprep.subr.mxu0 0.0
      %345 = vmatpush1.msra.mxu0 0.0
      %346 = vmatprep.subr.mxu0 0.0
      %347 = vmatpush1.msra.mxu0 0.0
      %348 = vmatprep.subr.mxu0 0.0
      %349 = vmatpush1.msra.mxu0 0.0
      %350 = vmatprep.subr.mxu0 0.0
      %351 = vmatpush1.msra.mxu0 0.0
      %352 = vmatprep.subr.mxu0 0.0
      %353 = vmatpush1.msra.mxu0 0.0
      %354 = vmatprep.subr.mxu0 0.0
      %355 = vmatpush1.msra.mxu0 0.0
      %356 = vmatprep.subr.mxu0 0.0
      %357 = vmatpush1.msra.mxu0 0.0
      %358 = vmatprep.subr.mxu0 0.0
      %359 = vmatpush1.msra.mxu0 0.0
      %360 = vmatprep.subr.mxu0 0.0
      %361 = vmatpush1.msra.mxu0 0.0
      %362 = vmatprep.subr.mxu0 0.0
      %363 = vmatpush1.msra.mxu0 0.0
      %364 = vmatprep.subr.mxu0 0.0
      %365 = vmatpush1.msra.mxu0 0.0
      %366 = vmatprep.subr.mxu0 0.0
      %367 = vmatpush1.msra.mxu0 0.0
      %368 = vmatprep.subr.mxu0 0.0
      %369 = vmatpush1.msra.mxu0 0.0
      %370 = vmatprep.subr.mxu0 0.0
      %371 = vmatpush1.msra.mxu0 0.0
      %372 = vmatprep.subr.mxu0 0.0
      %373 = vmatpush1.msra.mxu0 0.0
      %374 = vmatprep.subr.mxu0 0.0
      %375 = vmatpush1.msra.mxu0 0.0
      %376 = vmatprep.subr.mxu0 0.0
      %377 = vmatpush1.msra.mxu0 0.0
      %378 = vmatprep.mubr.f32.mxu0 0.0
      %379 = vmatmul.mubr.f32.gmra.mrb[0].mxu0 %v291
      %v380 = vpop.f32.mrb[0].mxu0
      %v381 = vadd.f32 %v277, %v380
      %v382 = vpop.f32.mrb[0].mxu0
      %v383 = vadd.f32 %v281, %v382
      %384 = vmatprep.mubr.f32.mxu0 0.0
      %385 = vmatmul.mubr.f32.gmra.mrb[0].mxu0 %v294
      %v386 = vpop.f32.mrb[0].mxu0
      %v387 = vadd.f32 %v277, %v386
      %v388 = vpop.f32.mrb[0].mxu0
      %v389 = vadd.f32 %v281, %v388
      %390 = vmatprep.mubr.f32.mxu0 0.0
      %391 = vmatmul.mubr.f32.gmra.mrb[0].mxu0 %v297
      %v392 = vpop.f32.mrb[0].mxu0
      %v393 = vadd.f32 %v277, %v392
      %v394 = vpop.f32.mrb[0].mxu0
      %v395 = vadd.f32 %v281, %v394
      %396 = vmatprep.mubr.f32.mxu0 0.0
      %397 = vmatmul.mubr.f32.gmra.mrb[0].mxu0 %v300
      %v398 = vpop.f32.mrb[0].mxu0
      %v399 = vadd.f32 %v277, %v398
      %v400 = vpop.f32.mrb[0].mxu0
      %v401 = vadd.f32 %v281, %v400
      %402 = vmatprep.mubr.f32.mxu0 0.0
      %403 = vmatmul.mubr.f32.gmra.mrb[0].mxu0 %v303
      %v404 = vpop.f32.mrb[0].mxu0
      %v405 = vadd.f32 %v277, %v404
      %v406 = vpop.f32.mrb[0].mxu0
      %v407 = vadd.f32 %v281, %v406
      %408 = vmatprep.mubr.f32.mxu0 0.0
      %409 = vmatmul.mubr.f32.gmra.mrb[0].mxu0 %v306
      %v410 = vpop.f32.mrb[0].mxu0
      %v411 = vadd.f32 %v277, %v410
      %v412 = vpop.f32.mrb[0].mxu0
      %v413 = vadd.f32 %v281, %v412
      %414 = vmatprep.mubr.f32.mxu0 0.0
      %415 = vmatmul.mubr.f32.gmra.mrb[0].mxu0 %v309
      %v416 = vpop.f32.mrb[0].mxu0
      %v417 = vadd.f32 %v277, %v416
      %v418 = vpop.f32.mrb[0].mxu0
      %v419 = vadd.f32 %v281, %v418
      %420 = vmatprep.mubr.f32.mxu0 0.0
      %421 = vmatmul.mubr.f32.gmra.mrb[0].mxu0 %v312
      %v422 = vpop.f32.mrb[0].mxu0
      %v423 = vadd.f32 %v277, %v422
      %v424 = vpop.f32.mrb[0].mxu0
      %v425 = vadd.f32 %v281, %v424
      %426 = vdwg.mxu0
      %427 = vmatprep.subr.mxu0 0.0
      %428 = vmatpush1.msra.mxu0 %v238
      %429 = vmatprep.subr.mxu0 0.0
      %430 = vmatpush1.msra.mxu0 %v241
      %431 = vmatprep.subr.mxu0 0.0
      %432 = vmatpush1.msra.mxu0 %v244
      %433 = vmatprep.subr.mxu0 0.0
      %434 = vmatpush1.msra.mxu0 %v247
      %435 = vmatprep.subr.mxu0 0.0
      %436 = vmatpush1.msra.mxu0 %v250
      %437 = vmatprep.subr.mxu0 0.0
      %438 = vmatpush1.msra.mxu0 %v253
      %439 = vmatprep.subr.mxu0 0.0
      %440 = vmatpush1.msra.mxu0 %v256
      %441 = vmatprep.subr.mxu0 0.0
      %442 = vmatpush1.msra.mxu0 %v259
      %443 = vmatprep.subr.mxu0 0.0
      %444 = vmatpush1.msra.mxu0 %v262
      %445 = vmatprep.subr.mxu0 0.0
      %446 = vmatpush1.msra.mxu0 %v265
      %447 = vmatprep.subr.mxu0 0.0
      %448 = vmatpush1.msra.mxu0 %v268
      %449 = vmatprep.subr.mxu0 0.0
      %450 = vmatpush1.msra.mxu0 %v271
      %451 = vmatprep.subr.mxu0 0.0
      %452 = vmatpush1.msra.mxu0 0.0
      %453 = vmatprep.subr.mxu0 0.0
      %454 = vmatpush1.msra.mxu0 0.0
      %455 = vmatprep.subr.mxu0 0.0
      %456 = vmatpush1.msra.mxu0 0.0
      %457 = vmatprep.subr.mxu0 0.0
      %458 = vmatpush1.msra.mxu0 0.0
      %459 = vmatprep.subr.mxu0 0.0
      %460 = vmatpush1.msra.mxu0 0.0
      %461 = vmatprep.subr.mxu0 0.0
      %462 = vmatpush1.msra.mxu0 0.0
      %463 = vmatprep.subr.mxu0 0.0
      %464 = vmatpush1.msra.mxu0 0.0
      %465 = vmatprep.subr.mxu0 0.0
      %466 = vmatpush1.msra.mxu0 0.0
      %467 = vmatprep.subr.mxu0 0.0
      %468 = vmatpush1.msra.mxu0 0.0
      %469 = vmatprep.subr.mxu0 0.0
      %470 = vmatpush1.msra.mxu0 0.0
      %471 = vmatprep.subr.mxu0 0.0
      %472 = vmatpush1.msra.mxu0 0.0
      %473 = vmatprep.subr.mxu0 0.0
      %474 = vmatpush1.msra.mxu0 0.0
      %475 = vmatprep.subr.mxu0 0.0
      %476 = vmatpush1.msra.mxu0 0.0
      %477 = vmatprep.subr.mxu0 0.0
      %478 = vmatpush1.msra.mxu0 0.0
      %479 = vmatprep.subr.mxu0 0.0
      %480 = vmatpush1.msra.mxu0 0.0
      %481 = vmatprep.subr.mxu0 0.0
      %482 = vmatpush1.msra.mxu0 0.0
      %483 = vmatprep.subr.mxu0 0.0
      %484 = vmatpush1.msra.mxu0 0.0
      %485 = vmatprep.subr.mxu0 0.0
      %486 = vmatpush1.msra.mxu0 0.0
      %487 = vmatprep.subr.mxu0 0.0
      %488 = vmatpush1.msra.mxu0 0.0
      %489 = vmatprep.subr.mxu0 0.0
      %490 = vmatpush1.msra.mxu0 0.0
      %491 = vmatprep.mubr.f32.mxu0 0.0
      %492 = vmatmul.mubr.f32.gmra.mrb[0].mxu0 %v291
      %v493 = vpop.f32.mrb[0].mxu0
      %v494 = vadd.f32 %v285, %v493
      %v495 = vpop.f32.mrb[0].mxu0
      %496 = vmatprep.mubr.f32.mxu0 0.0
      %497 = vmatmul.mubr.f32.gmra.mrb[0].mxu0 %v294
      %v498 = vpop.f32.mrb[0].mxu0
      %v499 = vadd.f32 %v285, %v498
      %v500 = vpop.f32.mrb[0].mxu0
      %501 = vmatprep.mubr.f32.mxu0 0.0
      %502 = vmatmul.mubr.f32.gmra.mrb[0].mxu0 %v297
      %v503 = vpop.f32.mrb[0].mxu0
      %v504 = vadd.f32 %v285, %v503
      %v505 = vpop.f32.mrb[0].mxu0
      %506 = vmatprep.mubr.f32.mxu0 0.0
      %507 = vmatmul.mubr.f32.gmra.mrb[0].mxu0 %v300
      %v508 = vpop.f32.mrb[0].mxu0
      %v509 = vadd.f32 %v285, %v508
      %v510 = vpop.f32.mrb[0].mxu0
      %511 = vmatprep.mubr.f32.mxu0 0.0
      %512 = vmatmul.mubr.f32.gmra.mrb[0].mxu0 %v303
      %v513 = vpop.f32.mrb[0].mxu0
      %v514 = vadd.f32 %v285, %v513
      %v515 = vpop.f32.mrb[0].mxu0
      %516 = vmatprep.mubr.f32.mxu0 0.0
      %517 = vmatmul.mubr.f32.gmra.mrb[0].mxu0 %v306
      %v518 = vpop.f32.mrb[0].mxu0
      %v519 = vadd.f32 %v285, %v518
      %v520 = vpop.f32.mrb[0].mxu0
      %521 = vmatprep.mubr.f32.mxu0 0.0
      %522 = vmatmul.mubr.f32.gmra.mrb[0].mxu0 %v309
      %v523 = vpop.f32.mrb[0].mxu0
      %v524 = vadd.f32 %v285, %v523
      %v525 = vpop.f32.mrb[0].mxu0
      %526 = vmatprep.mubr.f32.mxu0 0.0
      %527 = vmatmul.mubr.f32.gmra.mrb[0].mxu0 %v312
      %v528 = vpop.f32.mrb[0].mxu0
      %v529 = vadd.f32 %v285, %v528
      %v530 = vpop.f32.mrb[0].mxu0
      %531 = vdwg.mxu0
      %v532 = vmul.f32 %v381, 0.5
      %v533 = vmul.f32 %v383, 0.5
      %v534 = vmul.f32 %v494, 0.5
      %v535 = vmul.f32 %v387, 0.5
      %v536 = vmul.f32 %v389, 0.5
      %v537 = vmul.f32 %v499, 0.5
      %v538 = vmul.f32 %v393, 0.5
      %v539 = vmul.f32 %v395, 0.5
      %v540 = vmul.f32 %v504, 0.5
      %v541 = vmul.f32 %v399, 0.5
      %v542 = vmul.f32 %v401, 0.5
      %v543 = vmul.f32 %v509, 0.5
      %v544 = vmul.f32 %v405, 0.5
      %v545 = vmul.f32 %v407, 0.5
      %v546 = vmul.f32 %v514, 0.5
      %v547 = vmul.f32 %v411, 0.5
      %v548 = vmul.f32 %v413, 0.5
      %v549 = vmul.f32 %v519, 0.5
      %v550 = vmul.f32 %v417, 0.5
      %v551 = vmul.f32 %v419, 0.5
      %v552 = vmul.f32 %v524, 0.5
      %v553 = vmul.f32 %v423, 0.5
      %v554 = vmul.f32 %v425, 0.5
      %v555 = vmul.f32 %v529, 0.5
      %v556 = vmul.f32 %v381, 0.70710677
      %v557 = vmul.f32 %v383, 0.70710677
      %v558 = vmul.f32 %v494, 0.70710677
      %v559 = vmul.f32 %v387, 0.70710677
      %v560 = vmul.f32 %v389, 0.70710677
      %v561 = vmul.f32 %v499, 0.70710677
      %v562 = vmul.f32 %v393, 0.70710677
      %v563 = vmul.f32 %v395, 0.70710677
      %v564 = vmul.f32 %v504, 0.70710677
      %v565 = vmul.f32 %v399, 0.70710677
      %v566 = vmul.f32 %v401, 0.70710677
      %v567 = vmul.f32 %v509, 0.70710677
      %v568 = vmul.f32 %v405, 0.70710677
      %v569 = vmul.f32 %v407, 0.70710677
      %v570 = vmul.f32 %v514, 0.70710677
      %v571 = vmul.f32 %v411, 0.70710677
      %v572 = vmul.f32 %v413, 0.70710677
      %v573 = vmul.f32 %v519, 0.70710677
      %v574 = vmul.f32 %v417, 0.70710677
      %v575 = vmul.f32 %v419, 0.70710677
      %v576 = vmul.f32 %v524, 0.70710677
      %v577 = vmul.f32 %v423, 0.70710677
      %v578 = vmul.f32 %v425, 0.70710677
      %v579 = vmul.f32 %v529, 0.70710677
      %v580 = verf.f32.pop %v556
      %v581 = verf.f32.pop %v557
      %v582 = verf.f32.pop %v558
      %v583 = verf.f32.pop %v559
      %v584 = verf.f32.pop %v560
      %v585 = verf.f32.pop %v561
      %v586 = verf.f32.pop %v562
      %v587 = verf.f32.pop %v563
      %v588 = verf.f32.pop %v564
      %v589 = verf.f32.pop %v565
      %v590 = verf.f32.pop %v566
      %v591 = verf.f32.pop %v567
      %v592 = verf.f32.pop %v568
      %v593 = verf.f32.pop %v569
      %v594 = verf.f32.pop %v570
      %v595 = verf.f32.pop %v571
      %v596 = verf.f32.pop %v572
      %v597 = verf.f32.pop %v573
      %v598 = verf.f32.pop %v574
      %v599 = verf.f32.pop %v575
      %v600 = verf.f32.pop %v576
      %v601 = verf.f32.pop %v577
      %v602 = verf.f32.pop %v578
      %v603 = verf.f32.pop %v579
      %v604 = vadd.f32 %v580, 1.0
      %v605 = vadd.f32 %v581, 1.0
      %v606 = vadd.f32 %v582, 1.0
      %v607 = vadd.f32 %v583, 1.0
      %v608 = vadd.f32 %v584, 1.0
      %v609 = vadd.f32 %v585, 1.0
      %v610 = vadd.f32 %v586, 1.0
      %v611 = vadd.f32 %v587, 1.0
      %v612 = vadd.f32 %v588, 1.0
      %v613 = vadd.f32 %v589, 1.0
      %v614 = vadd.f32 %v590, 1.0
      %v615 = vadd.f32 %v591, 1.0
      %v616 = vadd.f32 %v592, 1.0
      %v617 = vadd.f32 %v593, 1.0
      %v618 = vadd.f32 %v594, 1.0
      %v619 = vadd.f32 %v595, 1.0
      %v620 = vadd.f32 %v596, 1.0
      %v621 = vadd.f32 %v597, 1.0
      %v622 = vadd.f32 %v598, 1.0
      %v623 = vadd.f32 %v599, 1.0
      %v624 = vadd.f32 %v600, 1.0
      %v625 = vadd.f32 %v601, 1.0
      %v626 = vadd.f32 %v602, 1.0
      %v627 = vadd.f32 %v603, 1.0
      %v628 = vmul.f32 %v532, %v604
      %v629 = vmul.f32 %v533, %v605
      %v630 = vmul.f32 %v534, %v606
      %v631 = vmul.f32 %v535, %v607
      %v632 = vmul.f32 %v536, %v608
      %v633 = vmul.f32 %v537, %v609
      %v634 = vmul.f32 %v538, %v610
      %v635 = vmul.f32 %v539, %v611
      %v636 = vmul.f32 %v540, %v612
      %v637 = vmul.f32 %v541, %v613
      %v638 = vmul.f32 %v542, %v614
      %v639 = vmul.f32 %v543, %v615
      %v640 = vmul.f32 %v544, %v616
      %v641 = vmul.f32 %v545, %v617
      %v642 = vmul.f32 %v546, %v618
      %v643 = vmul.f32 %v547, %v619
      %v644 = vmul.f32 %v548, %v620
      %v645 = vmul.f32 %v549, %v621
      %v646 = vmul.f32 %v550, %v622
      %v647 = vmul.f32 %v551, %v623
      %v648 = vmul.f32 %v552, %v624
      %v649 = vmul.f32 %v553, %v625
      %v650 = vmul.f32 %v554, %v626
      %v651 = vmul.f32 %v555, %v627
      %v652 = vld [vmem:[%s3] sm:$0xff]
      %v653 = vld [vmem:[%s3 + $0x8] sm:$0xff]
      %v654 = vld [vmem:[%s3 + $0x10] sm:$0xff]
      %v655 = vld [vmem:[%s3 + $0x18] sm:$0xff]
      %v656 = vld [vmem:[%s3 + $0x20] sm:$0xff]
      %v657 = vld [vmem:[%s3 + $0x28] sm:$0xff]
      %v658 = vld [vmem:[%s3 + $0x30] sm:$0xff]
      %v659 = vld [vmem:[%s3 + $0x38] sm:$0xff]
      %v660 = vld [vmem:[%s3 + $0x40] sm:$0xff]
      %v661 = vld [vmem:[%s3 + $0x48] sm:$0xff]
      %v662 = vld [vmem:[%s3 + $0x50] sm:$0xff]
      %v663 = vld [vmem:[%s3 + $0x58] sm:$0xff]
      %v664 = vld [vmem:[%s3 + $0x60] sm:$0xff]
      %v665 = vld [vmem:[%s3 + $0x68] sm:$0xff]
      %v666 = vld [vmem:[%s3 + $0x70] sm:$0xff]
      %v667 = vld [vmem:[%s3 + $0x78] sm:$0xff]
      %v668 = vld [vmem:[%s3 + $0x80] sm:$0xff]
      %v669 = vld [vmem:[%s3 + $0x88] sm:$0xff]
      %v670 = vld [vmem:[%s3 + $0x90] sm:$0xff]
      %v671 = vld [vmem:[%s3 + $0x98] sm:$0xff]
      %v672 = vld [vmem:[%s3 + $0xa0] sm:$0xff]
      %v673 = vld [vmem:[%s3 + $0xa8] sm:$0xff]
      %v674 = vld [vmem:[%s3 + $0xb0] sm:$0xff]
      %v675 = vld [vmem:[%s3 + $0xb8] sm:$0xff]
      %v676 = vld [vmem:[%s3 + $0xc0] sm:$0xff]
      %v677 = vld [vmem:[%s3 + $0xc8] sm:$0xff]
      %v678 = vld [vmem:[%s3 + $0xd0] sm:$0xff]
      %v679 = vld [vmem:[%s3 + $0xd8] sm:$0xff]
      %v680 = vld [vmem:[%s3 + $0xe0] sm:$0xff]
      %v681 = vld [vmem:[%s3 + $0xe8] sm:$0xff]
      %v682 = vld [vmem:[%s3 + $0xf0] sm:$0xff]
      %v683 = vld [vmem:[%s3 + $0xf8] sm:$0xff]
      %v684 = vld [vmem:[%s3 + $0x100] sm:$0xff]
      %v685 = vld [vmem:[%s3 + $0x108] sm:$0xff]
      %v686 = vld [vmem:[%s3 + $0x110] sm:$0xff]
      %v687 = vld [vmem:[%s3 + $0x118] sm:$0xff]
      %v688 = vld [vmem:[%s3 + $0x120] sm:$0xff]
      %v689 = vld [vmem:[%s3 + $0x128] sm:$0xff]
      %v690 = vld [vmem:[%s3 + $0x130] sm:$0xff]
      %v691 = vld [vmem:[%s3 + $0x138] sm:$0xff]
      %v692 = vld [vmem:[%s3 + $0x140] sm:$0xff]
      %v693 = vld [vmem:[%s3 + $0x148] sm:$0xff]
      %v694 = vld [vmem:[%s3 + $0x150] sm:$0xff]
      %v695 = vld [vmem:[%s3 + $0x158] sm:$0xff]
      %v696 = vld [vmem:[%s3 + $0x160] sm:$0xff]
      %v697 = vld [vmem:[%s3 + $0x168] sm:$0xff]
      %v698 = vld [vmem:[%s3 + $0x170] sm:$0xff]
      %v699 = vld [vmem:[%s3 + $0x178] sm:$0xff]
      %v700 = vld [vmem:[%s4] sm:$0x1]
      %v702 = vlaneseq
      %v703 = vshrl.u32 %v702, 7
      %v704 = vsub.s32 0, %v703
      %v705 = vrot.slane %v700, %v704
      %707 = vmatprep.subr.mxu0 0.0
      %708 = vmatpush1.msra.mxu0 %v652
      %709 = vmatprep.subr.mxu0 0.0
      %710 = vmatpush1.msra.mxu0 %v653
      %711 = vmatprep.subr.mxu0 0.0
      %712 = vmatpush1.msra.mxu0 %v654
      %713 = vmatprep.subr.mxu0 0.0
      %714 = vmatpush1.msra.mxu0 %v655
      %715 = vmatprep.subr.mxu0 0.0
      %716 = vmatpush1.msra.mxu0 %v656
      %717 = vmatprep.subr.mxu0 0.0
      %718 = vmatpush1.msra.mxu0 %v657
      %719 = vmatprep.subr.mxu0 0.0
      %720 = vmatpush1.msra.mxu0 %v658
      %721 = vmatprep.subr.mxu0 0.0
      %722 = vmatpush1.msra.mxu0 %v659
      %723 = vmatprep.subr.mxu0 0.0
      %724 = vmatpush1.msra.mxu0 %v660
      %725 = vmatprep.subr.mxu0 0.0
      %726 = vmatpush1.msra.mxu0 %v661
      %727 = vmatprep.subr.mxu0 0.0
      %728 = vmatpush1.msra.mxu0 %v662
      %729 = vmatprep.subr.mxu0 0.0
      %730 = vmatpush1.msra.mxu0 %v663
      %731 = vmatprep.subr.mxu0 0.0
      %732 = vmatpush1.msra.mxu0 %v664
      %733 = vmatprep.subr.mxu0 0.0
      %734 = vmatpush1.msra.mxu0 %v665
      %735 = vmatprep.subr.mxu0 0.0
      %736 = vmatpush1.msra.mxu0 %v666
      %737 = vmatprep.subr.mxu0 0.0
      %738 = vmatpush1.msra.mxu0 %v667
      %739 = vmatprep.subr.mxu0 0.0
      %740 = vmatpush1.msra.mxu0 %v668
      %741 = vmatprep.subr.mxu0 0.0
      %742 = vmatpush1.msra.mxu0 %v669
      %743 = vmatprep.subr.mxu0 0.0
      %744 = vmatpush1.msra.mxu0 %v670
      %745 = vmatprep.subr.mxu0 0.0
      %746 = vmatpush1.msra.mxu0 %v671
      %747 = vmatprep.subr.mxu0 0.0
      %748 = vmatpush1.msra.mxu0 %v672
      %749 = vmatprep.subr.mxu0 0.0
      %750 = vmatpush1.msra.mxu0 %v673
      %751 = vmatprep.subr.mxu0 0.0
      %752 = vmatpush1.msra.mxu0 %v674
      %753 = vmatprep.subr.mxu0 0.0
      %754 = vmatpush1.msra.mxu0 %v675
      %755 = vmatprep.subr.mxu0 0.0
      %756 = vmatpush1.msra.mxu0 %v676
      %757 = vmatprep.subr.mxu0 0.0
      %758 = vmatpush1.msra.mxu0 %v677
      %759 = vmatprep.subr.mxu0 0.0
      %760 = vmatpush1.msra.mxu0 %v678
      %761 = vmatprep.subr.mxu0 0.0
      %762 = vmatpush1.msra.mxu0 %v679
      %763 = vmatprep.subr.mxu0 0.0
      %764 = vmatpush1.msra.mxu0 %v680
      %765 = vmatprep.subr.mxu0 0.0
      %766 = vmatpush1.msra.mxu0 %v681
      %767 = vmatprep.subr.mxu0 0.0
      %768 = vmatpush1.msra.mxu0 %v682
      %769 = vmatprep.subr.mxu0 0.0
      %770 = vmatpush1.msra.mxu0 %v683
      %771 = vmatprep.mubr.f32.mxu0 %v629
      %772 = vmatmul.mubr.f32.gmra.mrb[0].mxu0 %v628
      %v773 = vpop.f32.mrb[0].mxu0
      %v774 = vadd.f32 %v705, %v773
      %v775 = vpop.f32.mrb[0].mxu0
      %776 = vmatprep.mubr.f32.mxu0 %v632
      %777 = vmatmul.mubr.f32.gmra.mrb[0].mxu0 %v631
      %v778 = vpop.f32.mrb[0].mxu0
      %v779 = vadd.f32 %v705, %v778
      %v780 = vpop.f32.mrb[0].mxu0
      %781 = vmatprep.mubr.f32.mxu0 %v635
      %782 = vmatmul.mubr.f32.gmra.mrb[0].mxu0 %v634
      %v783 = vpop.f32.mrb[0].mxu0
      %v784 = vadd.f32 %v705, %v783
      %v785 = vpop.f32.mrb[0].mxu0
      %786 = vmatprep.mubr.f32.mxu0 %v638
      %787 = vmatmul.mubr.f32.gmra.mrb[0].mxu0 %v637
      %v788 = vpop.f32.mrb[0].mxu0
      %v789 = vadd.f32 %v705, %v788
      %v790 = vpop.f32.mrb[0].mxu0
      %791 = vmatprep.mubr.f32.mxu0 %v641
      %792 = vmatmul.mubr.f32.gmra.mrb[0].mxu0 %v640
      %v793 = vpop.f32.mrb[0].mxu0
      %v794 = vadd.f32 %v705, %v793
      %v795 = vpop.f32.mrb[0].mxu0
      %796 = vmatprep.mubr.f32.mxu0 %v644
      %797 = vmatmul.mubr.f32.gmra.mrb[0].mxu0 %v643
      %v798 = vpop.f32.mrb[0].mxu0
      %v799 = vadd.f32 %v705, %v798
      %v800 = vpop.f32.mrb[0].mxu0
      %801 = vmatprep.mubr.f32.mxu0 %v647
      %802 = vmatmul.mubr.f32.gmra.mrb[0].mxu0 %v646
      %v803 = vpop.f32.mrb[0].mxu0
      %v804 = vadd.f32 %v705, %v803
      %v805 = vpop.f32.mrb[0].mxu0
      %806 = vmatprep.mubr.f32.mxu0 %v650
      %807 = vmatmul.mubr.f32.gmra.mrb[0].mxu0 %v649
      %v808 = vpop.f32.mrb[0].mxu0
      %v809 = vadd.f32 %v705, %v808
      %v810 = vpop.f32.mrb[0].mxu0
      %811 = vdwg.mxu0
      %812 = vmatprep.subr.mxu0 0.0
      %813 = vmatpush1.msra.mxu0 %v684
      %814 = vmatprep.subr.mxu0 0.0
      %815 = vmatpush1.msra.mxu0 %v685
      %816 = vmatprep.subr.mxu0 0.0
      %817 = vmatpush1.msra.mxu0 %v686
      %818 = vmatprep.subr.mxu0 0.0
      %819 = vmatpush1.msra.mxu0 %v687
      %820 = vmatprep.subr.mxu0 0.0
      %821 = vmatpush1.msra.mxu0 %v688
      %822 = vmatprep.subr.mxu0 0.0
      %823 = vmatpush1.msra.mxu0 %v689
      %824 = vmatprep.subr.mxu0 0.0
      %825 = vmatpush1.msra.mxu0 %v690
      %826 = vmatprep.subr.mxu0 0.0
      %827 = vmatpush1.msra.mxu0 %v691
      %828 = vmatprep.subr.mxu0 0.0
      %829 = vmatpush1.msra.mxu0 %v692
      %830 = vmatprep.subr.mxu0 0.0
      %831 = vmatpush1.msra.mxu0 %v693
      %832 = vmatprep.subr.mxu0 0.0
      %833 = vmatpush1.msra.mxu0 %v694
      %834 = vmatprep.subr.mxu0 0.0
      %835 = vmatpush1.msra.mxu0 %v695
      %836 = vmatprep.subr.mxu0 0.0
      %837 = vmatpush1.msra.mxu0 %v696
      %838 = vmatprep.subr.mxu0 0.0
      %839 = vmatpush1.msra.mxu0 %v697
      %840 = vmatprep.subr.mxu0 0.0
      %841 = vmatpush1.msra.mxu0 %v698
      %842 = vmatprep.subr.mxu0 0.0
      %843 = vmatpush1.msra.mxu0 %v699
      %844 = vmatprep.subr.mxu0 0.0
      %845 = vmatpush1.msra.mxu0 0.0
      %846 = vmatprep.subr.mxu0 0.0
      %847 = vmatpush1.msra.mxu0 0.0
      %848 = vmatprep.subr.mxu0 0.0
      %849 = vmatpush1.msra.mxu0 0.0
      %850 = vmatprep.subr.mxu0 0.0
      %851 = vmatpush1.msra.mxu0 0.0
      %852 = vmatprep.subr.mxu0 0.0
      %853 = vmatpush1.msra.mxu0 0.0
      %854 = vmatprep.subr.mxu0 0.0
      %855 = vmatpush1.msra.mxu0 0.0
      %856 = vmatprep.subr.mxu0 0.0
      %857 = vmatpush1.msra.mxu0 0.0
      %858 = vmatprep.subr.mxu0 0.0
      %859 = vmatpush1.msra.mxu0 0.0
      %860 = vmatprep.subr.mxu0 0.0
      %861 = vmatpush1.msra.mxu0 0.0
      %862 = vmatprep.subr.mxu0 0.0
      %863 = vmatpush1.msra.mxu0 0.0
      %864 = vmatprep.subr.mxu0 0.0
      %865 = vmatpush1.msra.mxu0 0.0
      %866 = vmatprep.subr.mxu0 0.0
      %867 = vmatpush1.msra.mxu0 0.0
      %868 = vmatprep.subr.mxu0 0.0
      %869 = vmatpush1.msra.mxu0 0.0
      %870 = vmatprep.subr.mxu0 0.0
      %871 = vmatpush1.msra.mxu0 0.0
      %872 = vmatprep.subr.mxu0 0.0
      %873 = vmatpush1.msra.mxu0 0.0
      %874 = vmatprep.subr.mxu0 0.0
      %875 = vmatpush1.msra.mxu0 0.0
      %876 = vmatprep.mubr.f32.mxu0 0.0
      %877 = vmatmul.mubr.f32.gmra.mrb[0].mxu0 %v630
      %v878 = vpop.f32.mrb[0].mxu0
      %v879 = vadd.f32 %v774, %v878
      %v880 = vpop.f32.mrb[0].mxu0
      %881 = vmatprep.mubr.f32.mxu0 0.0
      %882 = vmatmul.mubr.f32.gmra.mrb[0].mxu0 %v633
      %v883 = vpop.f32.mrb[0].mxu0
      %v884 = vadd.f32 %v779, %v883
      %v885 = vpop.f32.mrb[0].mxu0
      %886 = vmatprep.mubr.f32.mxu0 0.0
      %887 = vmatmul.mubr.f32.gmra.mrb[0].mxu0 %v636
      %v888 = vpop.f32.mrb[0].mxu0
      %v889 = vadd.f32 %v784, %v888
      %v890 = vpop.f32.mrb[0].mxu0
      %891 = vmatprep.mubr.f32.mxu0 0.0
      %892 = vmatmul.mubr.f32.gmra.mrb[0].mxu0 %v639
      %v893 = vpop.f32.mrb[0].mxu0
      %v894 = vadd.f32 %v789, %v893
      %v895 = vpop.f32.mrb[0].mxu0
      %896 = vmatprep.mubr.f32.mxu0 0.0
      %897 = vmatmul.mubr.f32.gmra.mrb[0].mxu0 %v642
      %v898 = vpop.f32.mrb[0].mxu0
      %v899 = vadd.f32 %v794, %v898
      %v900 = vpop.f32.mrb[0].mxu0
      %901 = vmatprep.mubr.f32.mxu0 0.0
      %902 = vmatmul.mubr.f32.gmra.mrb[0].mxu0 %v645
      %v903 = vpop.f32.mrb[0].mxu0
      %v904 = vadd.f32 %v799, %v903
      %v905 = vpop.f32.mrb[0].mxu0
      %906 = vmatprep.mubr.f32.mxu0 0.0
      %907 = vmatmul.mubr.f32.gmra.mrb[0].mxu0 %v648
      %v908 = vpop.f32.mrb[0].mxu0
      %v909 = vadd.f32 %v804, %v908
      %v910 = vpop.f32.mrb[0].mxu0
      %911 = vmatprep.mubr.f32.mxu0 0.0
      %912 = vmatmul.mubr.f32.gmra.mrb[0].mxu0 %v651
      %v913 = vpop.f32.mrb[0].mxu0
      %v914 = vadd.f32 %v809, %v913
      %v915 = vpop.f32.mrb[0].mxu0
      %916 = vdwg.mxu0
      %917 = vst.msk [vmem:[%s226] sm:$0xff] %vm289, %v879
      %918 = vst.msk [vmem:[%s226 + $0x8] sm:$0xff] %vm289, %v884
      %919 = vst.msk [vmem:[%s226 + $0x10] sm:$0xff] %vm289, %v889
      %920 = vst.msk [vmem:[%s226 + $0x18] sm:$0xff] %vm289, %v894
      %921 = vst.msk [vmem:[%s226 + $0x20] sm:$0xff] %vm289, %v899
      %922 = vst.msk [vmem:[%s226 + $0x28] sm:$0xff] %vm289, %v904
      %923 = vst.msk [vmem:[%s226 + $0x30] sm:$0xff] %vm289, %v909
      %924 = vst.msk [vmem:[%s226 + $0x38] sm:$0xff] %vm289, %v914
      %s925 = smul.u32 8, %s16
      %p926 = scmp.lt.s32.totalorder %s925, 15
      %s927 = scalar_select %p926, %s925, 15
      %s928 = smul.addr %s927, 8
      %s929 = scalar_lea.vmem %s5, %s928
      // Predicated region
      $region41: #{tpu_custom_call.1} parent=39 // pred_check
        %p930 = pneg %p144
      $region42: #{tpu_custom_call.1} parent=39 // pred_check_branch
        %932 = sbr.rel (%p930) target = $region44
      $region43: #{tpu_custom_call.1} parent=39 // pred_region
        %s933 = smul.u32 8, %s16
      $region44: #{tpu_custom_call.1} parent=39 // pred_fallthru
        _
    $region40: #{tpu_custom_call.1} parent=5 // pred_fallthru
      _
    %p934 = scmp.le.s32.totalorder 2, %s11
    // Predicated region
    $region45: #{tpu_custom_call.1} parent=5 // pred_check
      %p935 = pneg %p934
    $region46: #{tpu_custom_call.1} parent=5 // pred_check_branch
      %937 = sbr.rel (%p935) target = $region48
    $region47: #{tpu_custom_call.1} parent=5 // pred_region
      %s938 = ssub.s32 %s11, 2
      // Predicated region
      $region49: #{tpu_custom_call.1} parent=47 // pred_check
        %p939 = pneg %p150
      $region50: #{tpu_custom_call.1} parent=47 // pred_check_branch
        %941 = sbr.rel (%p939) target = $region52
      $region51: #{tpu_custom_call.1} parent=47 // pred_region
        %s942 = smul.u32 8, %s17
        %p943 = scmp.lt.s32.totalorder %s942, 15
        %s944 = scalar_select %p943, %s942, 15
        %s945 = smul.addr %s944, 8
        %s946 = scalar_lea.vmem %s5, %s945
      $region52: #{tpu_custom_call.1} parent=47 // pred_fallthru
        _
    $region48: #{tpu_custom_call.1} parent=5 // pred_fallthru
      _
  $region6: #{tpu_custom_call.1} parent=0 // loop_footer
    %s15 = sadd.s32 1, %s11
  $region7: #{tpu_custom_call.1} parent=0 // loop_footer_branch
    %10 = sbr.rel target = $region3
  $region8: #{tpu_custom_call.1} parent=0 // loop_exit
    _

// kernel: tpu_custom_call.1
$region0: #{tpu_custom_call.1}
  #allocation0 [shape = 'u32[]', space=smem, size = 0x4, offset = 0x4, fixed_abs, tag = 'smem constant byte address 0x4 - core index']
  #allocation1 [shape = 'u32[144,128]{1,0:T(1,128)}', space=vmem, size = 0x12000, scoped, tag = 'internal scratch']
  %s0 = inlined_call_operand.vmem [shape: f32[128,96], index: 0, kind: input, shape index: {}]
  %s1 = inlined_call_operand.vmem [shape: f32[96,384], index: 1, kind: input, shape index: {}]
  %s2 = inlined_call_operand.vmem [shape: f32[1,384], index: 2, kind: input, shape index: {}]
  %s3 = inlined_call_operand.vmem [shape: f32[384,96], index: 3, kind: input, shape index: {}]
  %s4 = inlined_call_operand.vmem [shape: f32[1,96], index: 4, kind: input, shape index: {}]
  %s5 = inlined_call_operand.vmem [shape: f32[128,96], index: 5, kind: output, shape index: {}]
  %s6 = sld [smem:[#allocation0]]
  $region53: #{tpu_custom_call.1} parent=0
    _
  %s8 = ssub.s32 1, %s6
  %s9 = scalar_select 0, %s8, %s6
  loop: start=0, step=1, limit=4
  $region2: #{tpu_custom_call.1} parent=0 // loop_pre_header
    _
  $region3: #{tpu_custom_call.1} parent=0 // loop_header
    %s11 = sphi 0, %s15
    %p12 = scmp.ge.s32.totalorder %s11, 4
    %s21 = sphi 0, %s23
    %s24 = sphi 0, %s21
    %s25 = sphi 0, %s24
    %s41 = sphi 0, %s25
    %s45 = sphi 0, %s45
    %s47 = sphi 0, %s45
    %s48 = sphi 0, %s47
    %s62 = sphi 0, %s48
    %s66 = sphi 0, %s66
    %s68 = sphi 0, %s66
    %s69 = sphi 0, %s68
    %s83 = sphi 0, %s69
    %s87 = sphi 0, %s87
    %s89 = sphi 0, %s87
    %s90 = sphi 0, %s89
    %s104 = sphi 0, %s90
    %s108 = sphi 0, %s108
    %s110 = sphi 0, %s108
    %s111 = sphi 0, %s110
    %s125 = sphi 0, %s111
    %s131 = sphi 0, %s133
    %s134 = sphi 0, %s131
    %s135 = sphi 0, %s134
    %s151 = sphi 0, %s135
  $region4: #{tpu_custom_call.1} parent=0 // loop_header_branch
    %14 = sbr.rel (%p12) target = $region8
  $region5: #{tpu_custom_call.1} parent=0 // loop_body
    %s16 = ssub.s32 %s11, 1
    %s17 = ssub.s32 %s11, 2
    %s18 = sadd.s32 %s11, 1
    %s19 = ssub.s32 %s11, %s18
    %p20 = scmp.eq.s32.totalorder %s19, 0
    %s22 = sadd.s32 %s21, 1
    %s23 = scalar_select %p20, %s21, %s22
    %p26 = pneg %p20
    %p27 = scmp.eq.s32.totalorder %s11, 1
    %p28 = por %p26, %p27
    %p29 = scmp.ne.s32.totalorder %s21, %s24
    %p30 = scmp.eq.s32.totalorder %s11, 0
    %p31 = por %p29, %p30
    %p32 = scmp.ne.s32.totalorder %s21, %s24
    %p33 = scmp.eq.s32.totalorder %s16, 1
    %p34 = por %p32, %p33
    %p35 = scmp.ne.s32.totalorder %s24, %s25
    %p36 = scmp.eq.s32.totalorder %s16, 0
    %p37 = por %p35, %p36
    %p38 = scmp.ne.s32.totalorder %s24, %s25
    %p39 = scmp.eq.s32.totalorder %s17, 1
    %p40 = por %p38, %p39
    %p42 = scmp.ne.s32.totalorder %s25, %s41
    %p43 = scmp.eq.s32.totalorder %s17, 0
    %p44 = por %p42, %p43
    %s46 = sadd.s32 %s45, 1
    %p49 = scmp.eq.s32.totalorder %s11, 1
    %p50 = scmp.ne.s32.totalorder %s45, %s47
    %p51 = scmp.eq.s32.totalorder %s11, 0
    %p52 = por %p50, %p51
    %p53 = scmp.ne.s32.totalorder %s45, %s47
    %p54 = scmp.eq.s32.totalorder %s16, 1
    %p55 = por %p53, %p54
    %p56 = scmp.ne.s32.totalorder %s47, %s48
    %p57 = scmp.eq.s32.totalorder %s16, 0
    %p58 = por %p56, %p57
    %p59 = scmp.ne.s32.totalorder %s47, %s48
    %p60 = scmp.eq.s32.totalorder %s17, 1
    %p61 = por %p59, %p60
    %p63 = scmp.ne.s32.totalorder %s48, %s62
    %p64 = scmp.eq.s32.totalorder %s17, 0
    %p65 = por %p63, %p64
    %s67 = sadd.s32 %s66, 1
    %p70 = scmp.eq.s32.totalorder %s11, 1
    %p71 = scmp.ne.s32.totalorder %s66, %s68
    %p72 = scmp.eq.s32.totalorder %s11, 0
    %p73 = por %p71, %p72
    %p74 = scmp.ne.s32.totalorder %s66, %s68
    %p75 = scmp.eq.s32.totalorder %s16, 1
    %p76 = por %p74, %p75
    %p77 = scmp.ne.s32.totalorder %s68, %s69
    %p78 = scmp.eq.s32.totalorder %s16, 0
    %p79 = por %p77, %p78
    %p80 = scmp.ne.s32.totalorder %s68, %s69
    %p81 = scmp.eq.s32.totalorder %s17, 1
    %p82 = por %p80, %p81
    %p84 = scmp.ne.s32.totalorder %s69, %s83
    %p85 = scmp.eq.s32.totalorder %s17, 0
    %p86 = por %p84, %p85
    %s88 = sadd.s32 %s87, 1
    %p91 = scmp.eq.s32.totalorder %s11, 1
    %p92 = scmp.ne.s32.totalorder %s87, %s89
    %p93 = scmp.eq.s32.totalorder %s11, 0
    %p94 = por %p92, %p93
    %p95 = scmp.ne.s32.totalorder %s87, %s89
    %p96 = scmp.eq.s32.totalorder %s16, 1
    %p97 = por %p95, %p96
    %p98 = scmp.ne.s32.totalorder %s89, %s90
    %p99 = scmp.eq.s32.totalorder %s16, 0
    %p100 = por %p98, %p99
    %p101 = scmp.ne.s32.totalorder %s89, %s90
    %p102 = scmp.eq.s32.totalorder %s17, 1
    %p103 = por %p101, %p102
    %p105 = scmp.ne.s32.totalorder %s90, %s104
    %p106 = scmp.eq.s32.totalorder %s17, 0
    %p107 = por %p105, %p106
    %s109 = sadd.s32 %s108, 1
    %p112 = scmp.eq.s32.totalorder %s11, 1
    %p113 = scmp.ne.s32.totalorder %s108, %s110
    %p114 = scmp.eq.s32.totalorder %s11, 0
    %p115 = por %p113, %p114
    %p116 = scmp.ne.s32.totalorder %s108, %s110
    %p117 = scmp.eq.s32.totalorder %s16, 1
    %p118 = por %p116, %p117
    %p119 = scmp.ne.s32.totalorder %s110, %s111
    %p120 = scmp.eq.s32.totalorder %s16, 0
    %p121 = por %p119, %p120
    %p122 = scmp.ne.s32.totalorder %s110, %s111
    %p123 = scmp.eq.s32.totalorder %s17, 1
    %p124 = por %p122, %p123
    %p126 = scmp.ne.s32.totalorder %s111, %s125
    %p127 = scmp.eq.s32.totalorder %s17, 0
    %p128 = por %p126, %p127
    %s129 = ssub.s32 %s11, %s18
    %p130 = scmp.eq.s32.totalorder %s129, 0
    %s132 = sadd.s32 %s131, 1
    %s133 = scalar_select %p130, %s131, %s132
    %p136 = pneg %p130
    %p137 = scmp.eq.s32.totalorder %s11, 1
    %p138 = por %p136, %p137
    %p139 = scmp.ne.s32.totalorder %s131, %s134
    %p140 = scmp.eq.s32.totalorder %s11, 0
    %p141 = por %p139, %p140
    %p142 = scmp.ne.s32.totalorder %s131, %s134
    %p143 = scmp.eq.s32.totalorder %s16, 1
    %p144 = por %p142, %p143
    %p145 = scmp.ne.s32.totalorder %s134, %s135
    %p146 = scmp.eq.s32.totalorder %s16, 0
    %p147 = por %p145, %p146
    %p148 = scmp.ne.s32.totalorder %s134, %s135
    %p149 = scmp.eq.s32.totalorder %s17, 1
    %p150 = por %p148, %p149
    %p152 = scmp.ne.s32.totalorder %s135, %s151
    %p153 = scmp.eq.s32.totalorder %s17, 0
    %p154 = por %p152, %p153
    %p155 = scmp.le.s32.totalorder 1, %s11
    %p156 = scmp.lt.s32.totalorder %s11, 3
    %p157 = pnand %p155, %p156
    %p158 = pneg %p157
    // Predicated region
    $region9: #{tpu_custom_call.1} parent=5 // pred_check
      _
    $region10: #{tpu_custom_call.1} parent=5 // pred_check_branch
      %160 = sbr.rel (%p157) target = $region12
    $region11: #{tpu_custom_call.1} parent=5 // pred_region
      %s161 = ssub.s32 %s11, 1
      // Predicated region
      $region13: #{tpu_custom_call.1} parent=11 // pred_check
        %p162 = pneg %p58
      $region14: #{tpu_custom_call.1} parent=11 // pred_check_branch
        %164 = sbr.rel (%p162) target = $region16
      $region15: #{tpu_custom_call.1} parent=11 // pred_region
        _
      $region16: #{tpu_custom_call.1} parent=11 // pred_fallthru
        _
      // Predicated region
      $region17: #{tpu_custom_call.1} parent=11 // pred_check
        %p165 = pneg %p79
      $region18: #{tpu_custom_call.1} parent=11 // pred_check_branch
        %167 = sbr.rel (%p165) target = $region20
      $region19: #{tpu_custom_call.1} parent=11 // pred_region
        _
      $region20: #{tpu_custom_call.1} parent=11 // pred_fallthru
        _
      // Predicated region
      $region21: #{tpu_custom_call.1} parent=11 // pred_check
        %p168 = pneg %p100
      $region22: #{tpu_custom_call.1} parent=11 // pred_check_branch
        %170 = sbr.rel (%p168) target = $region24
      $region23: #{tpu_custom_call.1} parent=11 // pred_region
        _
      $region24: #{tpu_custom_call.1} parent=11 // pred_fallthru
        _
      // Predicated region
      $region25: #{tpu_custom_call.1} parent=11 // pred_check
        %p171 = pneg %p121
      $region26: #{tpu_custom_call.1} parent=11 // pred_check_branch
        %173 = sbr.rel (%p171) target = $region28
      $region27: #{tpu_custom_call.1} parent=11 // pred_region
        _
      $region28: #{tpu_custom_call.1} parent=11 // pred_fallthru
        _
    $region12: #{tpu_custom_call.1} parent=5 // pred_fallthru
      _
    %p174 = scmp.lt.s32.totalorder %s11, 2
    // Predicated region
    $region29: #{tpu_custom_call.1} parent=5 // pred_check
      %p175 = pneg %p174
    $region30: #{tpu_custom_call.1} parent=5 // pred_check_branch
      %177 = sbr.rel (%p175) target = $region32
    $region31: #{tpu_custom_call.1} parent=5 // pred_region
      // Predicated region
      $region33: #{tpu_custom_call.1} parent=31 // pred_check
        %p178 = pneg %p31
      $region34: #{tpu_custom_call.1} parent=31 // pred_check_branch
        %180 = sbr.rel (%p178) target = $region36
      $region35: #{tpu_custom_call.1} parent=31 // pred_region
        %s181 = smul.u32 8, %s11
        %p182 = scmp.lt.s32.totalorder %s181, 15
        %s183 = scalar_select %p182, %s181, 15
        %s184 = smul.addr %s183, 8
        %s185 = scalar_lea.vmem %s0, %s184
        %s186 = smul.u32 8, %s11
      $region36: #{tpu_custom_call.1} parent=31 // pred_fallthru
        _
    $region32: #{tpu_custom_call.1} parent=5 // pred_fallthru
      _
    %p187 = scmp.le.s32.totalorder 1, %s11
    %p188 = scmp.lt.s32.totalorder %s11, 3
    %p189 = pnand %p187, %p188
    %p190 = pneg %p189
    // Predicated region
    $region37: #{tpu_custom_call.1} parent=5 // pred_check
      _
    $region38: #{tpu_custom_call.1} parent=5 // pred_check_branch
      %192 = sbr.rel (%p189) target = $region40
    $region39: #{tpu_custom_call.1} parent=5 // pred_region
      %s193 = ssub.s32 %s11, 1
      %s194 = smul.u32 8, %s16
      %p195 = scmp.lt.s32.totalorder %s194, 15
      %s196 = scalar_select %p195, %s194, 15
      %s197 = smul.addr %s196, 8
      %s198 = scalar_lea.vmem %s0, %s197
      %p199 = pneg %p37
      %p200 = pneg %p34
      %p201 = pneg %p58
      %p202 = pneg %p55
      %p203 = pneg %p79
      %p204 = pneg %p76
      %p205 = pneg %p100
      %p206 = pneg %p97
      %p207 = pneg %p121
      %p208 = pneg %p118
      %p209 = pneg %p147
      %p210 = pneg %p144
      %s211 = smul.u32 8, %s16
      %p212 = scmp.lt.s32.totalorder %s211, 15
      %s213 = scalar_select %p212, %s211, 15
      %s214 = smul.addr %s213, 8
      %s215 = scalar_lea.vmem %s5, %s214
      %s216 = smul.u32 8, %s16
      %p217 = scmp.lt.s32.totalorder %s216, 15
      %s218 = scalar_select %p217, %s216, 15
      %s219 = smul.addr %s218, 8
      %s220 = scalar_lea.vmem %s0, %s219
      %s221 = smul.u32 8, %s16
      %s222 = smul.u32 8, %s16
      %p223 = scmp.lt.s32.totalorder %s222, 15
      %s224 = scalar_select %p223, %s222, 15
      %s225 = smul.addr %s224, 8
      %s226 = scalar_lea.vmem %s5, %s225
      %s227 = smul.u32 8, %s16
      %v228 = vld [vmem:[%s220] sm:$0xff]
      %v229 = vld [vmem:[%s220 + $0x8] sm:$0xff]
      %v230 = vld [vmem:[%s220 + $0x10] sm:$0xff]
      %v231 = vld [vmem:[%s220 + $0x18] sm:$0xff]
      %v232 = vld [vmem:[%s220 + $0x20] sm:$0xff]
      %v233 = vld [vmem:[%s220 + $0x28] sm:$0xff]
      %v234 = vld [vmem:[%s220 + $0x30] sm:$0xff]
      %v235 = vld [vmem:[%s220 + $0x38] sm:$0xff]
      %v236 = vld [vmem:[%s1] sm:$0xff]
      %v237 = vld [vmem:[%s1 + $0x8] sm:$0xff]
      %v238 = vld [vmem:[%s1 + $0x10] sm:$0xff]
      %v239 = vld [vmem:[%s1 + $0x18] sm:$0xff]
      %v240 = vld [vmem:[%s1 + $0x20] sm:$0xff]
      %v241 = vld [vmem:[%s1 + $0x28] sm:$0xff]
      %v242 = vld [vmem:[%s1 + $0x30] sm:$0xff]
      %v243 = vld [vmem:[%s1 + $0x38] sm:$0xff]
      %v244 = vld [vmem:[%s1 + $0x40] sm:$0xff]
      %v245 = vld [vmem:[%s1 + $0x48] sm:$0xff]
      %v246 = vld [vmem:[%s1 + $0x50] sm:$0xff]
      %v247 = vld [vmem:[%s1 + $0x58] sm:$0xff]
      %v248 = vld [vmem:[%s1 + $0x60] sm:$0xff]
      %v249 = vld [vmem:[%s1 + $0x68] sm:$0xff]
      %v250 = vld [vmem:[%s1 + $0x70] sm:$0xff]
      %v251 = vld [vmem:[%s1 + $0x78] sm:$0xff]
      %v252 = vld [vmem:[%s1 + $0x80] sm:$0xff]
      %v253 = vld [vmem:[%s1 + $0x88] sm:$0xff]
      %v254 = vld [vmem:[%s1 + $0x90] sm:$0xff]
      %v255 = vld [vmem:[%s1 + $0x98] sm:$0xff]
      %v256 = vld [vmem:[%s1 + $0xa0] sm:$0xff]
      %v257 = vld [vmem:[%s1 + $0xa8] sm:$0xff]
      %v258 = vld [vmem:[%s1 + $0xb0] sm:$0xff]
      %v259 = vld [vmem:[%s1 + $0xb8] sm:$0xff]
      %v260 = vld [vmem:[%s1 + $0xc0] sm:$0xff]
      %v261 = vld [vmem:[%s1 + $0xc8] sm:$0xff]
      %v262 = vld [vmem:[%s1 + $0xd0] sm:$0xff]
      %v263 = vld [vmem:[%s1 + $0xd8] sm:$0xff]
      %v264 = vld [vmem:[%s1 + $0xe0] sm:$0xff]
      %v265 = vld [vmem:[%s1 + $0xe8] sm:$0xff]
      %v266 = vld [vmem:[%s1 + $0xf0] sm:$0xff]
      %v267 = vld [vmem:[%s1 + $0xf8] sm:$0xff]
      %v268 = vld [vmem:[%s1 + $0x100] sm:$0xff]
      %v269 = vld [vmem:[%s1 + $0x108] sm:$0xff]
      %v270 = vld [vmem:[%s1 + $0x110] sm:$0xff]
      %v271 = vld [vmem:[%s1 + $0x118] sm:$0xff]
      %v272 = vld [vmem:[%s2] sm:$0x7]
      %v274 = vlaneseq
      %v275 = vshrl.u32 %v274, 7
      %v276 = vsub.s32 0, %v275
      %v277 = vrot.slane %v272, %v276
      %v278 = vlaneseq
      %v279 = vshrl.u32 %v278, 7
      %v280 = vsub.s32 1, %v279
      %v281 = vrot.slane %v272, %v280
      %v282 = vlaneseq
      %v283 = vshrl.u32 %v282, 7
      %v284 = vsub.s32 2, %v283
      %v285 = vrot.slane %v272, %v284
      %vm289 = vcmask 785408
      %v291 = vsel %vm289, %v228, 0
      %v294 = vsel %vm289, %v229, 0
      %v297 = vsel %vm289, %v230, 0
      %v300 = vsel %vm289, %v231, 0
      %v303 = vsel %vm289, %v232, 0
      %v306 = vsel %vm289, %v233, 0
      %v309 = vsel %vm289, %v234, 0
      %v312 = vsel %vm289, %v235, 0
      %314 = vmatprep.subr.mxu0 %v237
      %315 = vmatpush1.msra.mxu0 %v236
      %316 = vmatprep.subr.mxu0 %v240
      %317 = vmatpush1.msra.mxu0 %v239
      %318 = vmatprep.subr.mxu0 %v243
      %319 = vmatpush1.msra.mxu0 %v242
      %320 = vmatprep.subr.mxu0 %v246
      %321 = vmatpush1.msra.mxu0 %v245
      %322 = vmatprep.subr.mxu0 %v249
      %323 = vmatpush1.msra.mxu0 %v248
      %324 = vmatprep.subr.mxu0 %v252
      %325 = vmatpush1.msra.mxu0 %v251
      %326 = vmatprep.subr.mxu0 %v255
      %327 = vmatpush1.msra.mxu0 %v254
      %328 = vmatprep.subr.mxu0 %v258
      %329 = vmatpush1.msra.mxu0 %v257
      %330 = vmatprep.subr.mxu0 %v261
      %331 = vmatpush1.msra.mxu0 %v260
      %332 = vmatprep.subr.mxu0 %v264
      %333 = vmatpush1.msra.mxu0 %v263
      %334 = vmatprep.subr.mxu0 %v267
      %335 = vmatpush1.msra.mxu0 %v266
      %336 = vmatprep.subr.mxu0 %v270
      %337 = vmatpush1.msra.mxu0 %v269
      %338 = vmatprep.subr.mxu0 0.0
      %339 = vmatpush1.msra.mxu0 0.0
      %340 = vmatprep.subr.mxu0 0.0
      %341 = vmatpush1.msra.mxu0 0.0
      %342 = vmatprep.subr.mxu0 0.0
      %343 = vmatpush1.msra.mxu0 0.0
      %344 = vmatprep.subr.mxu0 0.0
      %345 = vmatpush1.msra.mxu0 0.0
      %346 = vmatprep.subr.mxu0 0.0
      %347 = vmatpush1.msra.mxu0 0.0
      %348 = vmatprep.subr.mxu0 0.0
      %349 = vmatpush1.msra.mxu0 0.0
      %350 = vmatprep.subr.mxu0 0.0
      %351 = vmatpush1.msra.mxu0 0.0
      %352 = vmatprep.subr.mxu0 0.0
      %353 = vmatpush1.msra.mxu0 0.0
      %354 = vmatprep.subr.mxu0 0.0
      %355 = vmatpush1.msra.mxu0 0.0
      %356 = vmatprep.subr.mxu0 0.0
      %357 = vmatpush1.msra.mxu0 0.0
      %358 = vmatprep.subr.mxu0 0.0
      %359 = vmatpush1.msra.mxu0 0.0
      %360 = vmatprep.subr.mxu0 0.0
      %361 = vmatpush1.msra.mxu0 0.0
      %362 = vmatprep.subr.mxu0 0.0
      %363 = vmatpush1.msra.mxu0 0.0
      %364 = vmatprep.subr.mxu0 0.0
      %365 = vmatpush1.msra.mxu0 0.0
      %366 = vmatprep.subr.mxu0 0.0
      %367 = vmatpush1.msra.mxu0 0.0
      %368 = vmatprep.subr.mxu0 0.0
      %369 = vmatpush1.msra.mxu0 0.0
      %370 = vmatprep.subr.mxu0 0.0
      %371 = vmatpush1.msra.mxu0 0.0
      %372 = vmatprep.subr.mxu0 0.0
      %373 = vmatpush1.msra.mxu0 0.0
      %374 = vmatprep.subr.mxu0 0.0
      %375 = vmatpush1.msra.mxu0 0.0
      %376 = vmatprep.subr.mxu0 0.0
      %377 = vmatpush1.msra.mxu0 0.0
      %378 = vmatprep.mubr.f32.mxu0 0.0
      %379 = vmatmul.mubr.f32.gmra.mrb[0].mxu0 %v291
      %v380 = vpop.f32.mrb[0].mxu0
      %v381 = vadd.f32 %v277, %v380
      %v382 = vpop.f32.mrb[0].mxu0
      %v383 = vadd.f32 %v281, %v382
      %384 = vmatprep.mubr.f32.mxu0 0.0
      %385 = vmatmul.mubr.f32.gmra.mrb[0].mxu0 %v294
      %v386 = vpop.f32.mrb[0].mxu0
      %v387 = vadd.f32 %v277, %v386
      %v388 = vpop.f32.mrb[0].mxu0
      %v389 = vadd.f32 %v281, %v388
      %390 = vmatprep.mubr.f32.mxu0 0.0
      %391 = vmatmul.mubr.f32.gmra.mrb[0].mxu0 %v297
      %v392 = vpop.f32.mrb[0].mxu0
      %v393 = vadd.f32 %v277, %v392
      %v394 = vpop.f32.mrb[0].mxu0
      %v395 = vadd.f32 %v281, %v394
      %396 = vmatprep.mubr.f32.mxu0 0.0
      %397 = vmatmul.mubr.f32.gmra.mrb[0].mxu0 %v300
      %v398 = vpop.f32.mrb[0].mxu0
      %v399 = vadd.f32 %v277, %v398
      %v400 = vpop.f32.mrb[0].mxu0
      %v401 = vadd.f32 %v281, %v400
      %402 = vmatprep.mubr.f32.mxu0 0.0
      %403 = vmatmul.mubr.f32.gmra.mrb[0].mxu0 %v303
      %v404 = vpop.f32.mrb[0].mxu0
      %v405 = vadd.f32 %v277, %v404
      %v406 = vpop.f32.mrb[0].mxu0
      %v407 = vadd.f32 %v281, %v406
      %408 = vmatprep.mubr.f32.mxu0 0.0
      %409 = vmatmul.mubr.f32.gmra.mrb[0].mxu0 %v306
      %v410 = vpop.f32.mrb[0].mxu0
      %v411 = vadd.f32 %v277, %v410
      %v412 = vpop.f32.mrb[0].mxu0
      %v413 = vadd.f32 %v281, %v412
      %414 = vmatprep.mubr.f32.mxu0 0.0
      %415 = vmatmul.mubr.f32.gmra.mrb[0].mxu0 %v309
      %v416 = vpop.f32.mrb[0].mxu0
      %v417 = vadd.f32 %v277, %v416
      %v418 = vpop.f32.mrb[0].mxu0
      %v419 = vadd.f32 %v281, %v418
      %420 = vmatprep.mubr.f32.mxu0 0.0
      %421 = vmatmul.mubr.f32.gmra.mrb[0].mxu0 %v312
      %v422 = vpop.f32.mrb[0].mxu0
      %v423 = vadd.f32 %v277, %v422
      %v424 = vpop.f32.mrb[0].mxu0
      %v425 = vadd.f32 %v281, %v424
      %426 = vdwg.mxu0
      %427 = vmatprep.subr.mxu0 0.0
      %428 = vmatpush1.msra.mxu0 %v238
      %429 = vmatprep.subr.mxu0 0.0
      %430 = vmatpush1.msra.mxu0 %v241
      %431 = vmatprep.subr.mxu0 0.0
      %432 = vmatpush1.msra.mxu0 %v244
      %433 = vmatprep.subr.mxu0 0.0
      %434 = vmatpush1.msra.mxu0 %v247
      %435 = vmatprep.subr.mxu0 0.0
      %436 = vmatpush1.msra.mxu0 %v250
      %437 = vmatprep.subr.mxu0 0.0
      %438 = vmatpush1.msra.mxu0 %v253
      %439 = vmatprep.subr.mxu0 0.0
      %440 = vmatpush1.msra.mxu0 %v256
      %441 = vmatprep.subr.mxu0 0.0
      %442 = vmatpush1.msra.mxu0 %v259
      %443 = vmatprep.subr.mxu0 0.0
      %444 = vmatpush1.msra.mxu0 %v262
      %445 = vmatprep.subr.mxu0 0.0
      %446 = vmatpush1.msra.mxu0 %v265
      %447 = vmatprep.subr.mxu0 0.0
      %448 = vmatpush1.msra.mxu0 %v268
      %449 = vmatprep.subr.mxu0 0.0
      %450 = vmatpush1.msra.mxu0 %v271
      %451 = vmatprep.subr.mxu0 0.0
      %452 = vmatpush1.msra.mxu0 0.0
      %453 = vmatprep.subr.mxu0 0.0
      %454 = vmatpush1.msra.mxu0 0.0
      %455 = vmatprep.subr.mxu0 0.0
      %456 = vmatpush1.msra.mxu0 0.0
      %457 = vmatprep.subr.mxu0 0.0
      %458 = vmatpush1.msra.mxu0 0.0
      %459 = vmatprep.subr.mxu0 0.0
      %460 = vmatpush1.msra.mxu0 0.0
      %461 = vmatprep.subr.mxu0 0.0
      %462 = vmatpush1.msra.mxu0 0.0
      %463 = vmatprep.subr.mxu0 0.0
      %464 = vmatpush1.msra.mxu0 0.0
      %465 = vmatprep.subr.mxu0 0.0
      %466 = vmatpush1.msra.mxu0 0.0
      %467 = vmatprep.subr.mxu0 0.0
      %468 = vmatpush1.msra.mxu0 0.0
      %469 = vmatprep.subr.mxu0 0.0
      %470 = vmatpush1.msra.mxu0 0.0
      %471 = vmatprep.subr.mxu0 0.0
      %472 = vmatpush1.msra.mxu0 0.0
      %473 = vmatprep.subr.mxu0 0.0
      %474 = vmatpush1.msra.mxu0 0.0
      %475 = vmatprep.subr.mxu0 0.0
      %476 = vmatpush1.msra.mxu0 0.0
      %477 = vmatprep.subr.mxu0 0.0
      %478 = vmatpush1.msra.mxu0 0.0
      %479 = vmatprep.subr.mxu0 0.0
      %480 = vmatpush1.msra.mxu0 0.0
      %481 = vmatprep.subr.mxu0 0.0
      %482 = vmatpush1.msra.mxu0 0.0
      %483 = vmatprep.subr.mxu0 0.0
      %484 = vmatpush1.msra.mxu0 0.0
      %485 = vmatprep.subr.mxu0 0.0
      %486 = vmatpush1.msra.mxu0 0.0
      %487 = vmatprep.subr.mxu0 0.0
      %488 = vmatpush1.msra.mxu0 0.0
      %489 = vmatprep.subr.mxu0 0.0
      %490 = vmatpush1.msra.mxu0 0.0
      %491 = vmatprep.mubr.f32.mxu0 0.0
      %492 = vmatmul.mubr.f32.gmra.mrb[0].mxu0 %v291
      %v493 = vpop.f32.mrb[0].mxu0
      %v494 = vadd.f32 %v285, %v493
      %v495 = vpop.f32.mrb[0].mxu0
      %496 = vmatprep.mubr.f32.mxu0 0.0
      %497 = vmatmul.mubr.f32.gmra.mrb[0].mxu0 %v294
      %v498 = vpop.f32.mrb[0].mxu0
      %v499 = vadd.f32 %v285, %v498
      %v500 = vpop.f32.mrb[0].mxu0
      %501 = vmatprep.mubr.f32.mxu0 0.0
      %502 = vmatmul.mubr.f32.gmra.mrb[0].mxu0 %v297
      %v503 = vpop.f32.mrb[0].mxu0
      %v504 = vadd.f32 %v285, %v503
      %v505 = vpop.f32.mrb[0].mxu0
      %506 = vmatprep.mubr.f32.mxu0 0.0
      %507 = vmatmul.mubr.f32.gmra.mrb[0].mxu0 %v300
      %v508 = vpop.f32.mrb[0].mxu0
      %v509 = vadd.f32 %v285, %v508
      %v510 = vpop.f32.mrb[0].mxu0
      %511 = vmatprep.mubr.f32.mxu0 0.0
      %512 = vmatmul.mubr.f32.gmra.mrb[0].mxu0 %v303
      %v513 = vpop.f32.mrb[0].mxu0
      %v514 = vadd.f32 %v285, %v513
      %v515 = vpop.f32.mrb[0].mxu0
      %516 = vmatprep.mubr.f32.mxu0 0.0
      %517 = vmatmul.mubr.f32.gmra.mrb[0].mxu0 %v306
      %v518 = vpop.f32.mrb[0].mxu0
      %v519 = vadd.f32 %v285, %v518
      %v520 = vpop.f32.mrb[0].mxu0
      %521 = vmatprep.mubr.f32.mxu0 0.0
      %522 = vmatmul.mubr.f32.gmra.mrb[0].mxu0 %v309
      %v523 = vpop.f32.mrb[0].mxu0
      %v524 = vadd.f32 %v285, %v523
      %v525 = vpop.f32.mrb[0].mxu0
      %526 = vmatprep.mubr.f32.mxu0 0.0
      %527 = vmatmul.mubr.f32.gmra.mrb[0].mxu0 %v312
      %v528 = vpop.f32.mrb[0].mxu0
      %v529 = vadd.f32 %v285, %v528
      %v530 = vpop.f32.mrb[0].mxu0
      %531 = vdwg.mxu0
      %v532 = vmul.f32 %v381, 0.5
      %v533 = vmul.f32 %v383, 0.5
      %v534 = vmul.f32 %v494, 0.5
      %v535 = vmul.f32 %v387, 0.5
      %v536 = vmul.f32 %v389, 0.5
      %v537 = vmul.f32 %v499, 0.5
      %v538 = vmul.f32 %v393, 0.5
      %v539 = vmul.f32 %v395, 0.5
      %v540 = vmul.f32 %v504, 0.5
      %v541 = vmul.f32 %v399, 0.5
      %v542 = vmul.f32 %v401, 0.5
      %v543 = vmul.f32 %v509, 0.5
      %v544 = vmul.f32 %v405, 0.5
      %v545 = vmul.f32 %v407, 0.5
      %v546 = vmul.f32 %v514, 0.5
      %v547 = vmul.f32 %v411, 0.5
      %v548 = vmul.f32 %v413, 0.5
      %v549 = vmul.f32 %v519, 0.5
      %v550 = vmul.f32 %v417, 0.5
      %v551 = vmul.f32 %v419, 0.5
      %v552 = vmul.f32 %v524, 0.5
      %v553 = vmul.f32 %v423, 0.5
      %v554 = vmul.f32 %v425, 0.5
      %v555 = vmul.f32 %v529, 0.5
      %v556 = vmul.f32 %v381, 0.70710677
      %v557 = vmul.f32 %v383, 0.70710677
      %v558 = vmul.f32 %v494, 0.70710677
      %v559 = vmul.f32 %v387, 0.70710677
      %v560 = vmul.f32 %v389, 0.70710677
      %v561 = vmul.f32 %v499, 0.70710677
      %v562 = vmul.f32 %v393, 0.70710677
      %v563 = vmul.f32 %v395, 0.70710677
      %v564 = vmul.f32 %v504, 0.70710677
      %v565 = vmul.f32 %v399, 0.70710677
      %v566 = vmul.f32 %v401, 0.70710677
      %v567 = vmul.f32 %v509, 0.70710677
      %v568 = vmul.f32 %v405, 0.70710677
      %v569 = vmul.f32 %v407, 0.70710677
      %v570 = vmul.f32 %v514, 0.70710677
      %v571 = vmul.f32 %v411, 0.70710677
      %v572 = vmul.f32 %v413, 0.70710677
      %v573 = vmul.f32 %v519, 0.70710677
      %v574 = vmul.f32 %v417, 0.70710677
      %v575 = vmul.f32 %v419, 0.70710677
      %v576 = vmul.f32 %v524, 0.70710677
      %v577 = vmul.f32 %v423, 0.70710677
      %v578 = vmul.f32 %v425, 0.70710677
      %v579 = vmul.f32 %v529, 0.70710677
      %v580 = verf.f32.pop %v556
      %v581 = verf.f32.pop %v557
      %v582 = verf.f32.pop %v558
      %v583 = verf.f32.pop %v559
      %v584 = verf.f32.pop %v560
      %v585 = verf.f32.pop %v561
      %v586 = verf.f32.pop %v562
      %v587 = verf.f32.pop %v563
      %v588 = verf.f32.pop %v564
      %v589 = verf.f32.pop %v565
      %v590 = verf.f32.pop %v566
      %v591 = verf.f32.pop %v567
      %v592 = verf.f32.pop %v568
      %v593 = verf.f32.pop %v569
      %v594 = verf.f32.pop %v570
      %v595 = verf.f32.pop %v571
      %v596 = verf.f32.pop %v572
      %v597 = verf.f32.pop %v573
      %v598 = verf.f32.pop %v574
      %v599 = verf.f32.pop %v575
      %v600 = verf.f32.pop %v576
      %v601 = verf.f32.pop %v577
      %v602 = verf.f32.pop %v578
      %v603 = verf.f32.pop %v579
      %v604 = vadd.f32 %v580, 1.0
      %v605 = vadd.f32 %v581, 1.0
      %v606 = vadd.f32 %v582, 1.0
      %v607 = vadd.f32 %v583, 1.0
      %v608 = vadd.f32 %v584, 1.0
      %v609 = vadd.f32 %v585, 1.0
      %v610 = vadd.f32 %v586, 1.0
      %v611 = vadd.f32 %v587, 1.0
      %v612 = vadd.f32 %v588, 1.0
      %v613 = vadd.f32 %v589, 1.0
      %v614 = vadd.f32 %v590, 1.0
      %v615 = vadd.f32 %v591, 1.0
      %v616 = vadd.f32 %v592, 1.0
      %v617 = vadd.f32 %v593, 1.0
      %v618 = vadd.f32 %v594, 1.0
      %v619 = vadd.f32 %v595, 1.0
      %v620 = vadd.f32 %v596, 1.0
      %v621 = vadd.f32 %v597, 1.0
      %v622 = vadd.f32 %v598, 1.0
      %v623 = vadd.f32 %v599, 1.0
      %v624 = vadd.f32 %v600, 1.0
      %v625 = vadd.f32 %v601, 1.0
      %v626 = vadd.f32 %v602, 1.0
      %v627 = vadd.f32 %v603, 1.0
      %v628 = vmul.f32 %v532, %v604
      %v629 = vmul.f32 %v533, %v605
      %v630 = vmul.f32 %v534, %v606
      %v631 = vmul.f32 %v535, %v607
      %v632 = vmul.f32 %v536, %v608
      %v633 = vmul.f32 %v537, %v609
      %v634 = vmul.f32 %v538, %v610
      %v635 = vmul.f32 %v539, %v611
      %v636 = vmul.f32 %v540, %v612
      %v637 = vmul.f32 %v541, %v613
      %v638 = vmul.f32 %v542, %v614
      %v639 = vmul.f32 %v543, %v615
      %v640 = vmul.f32 %v544, %v616
      %v641 = vmul.f32 %v545, %v617
      %v642 = vmul.f32 %v546, %v618
      %v643 = vmul.f32 %v547, %v619
      %v644 = vmul.f32 %v548, %v620
      %v645 = vmul.f32 %v549, %v621
      %v646 = vmul.f32 %v550, %v622
      %v647 = vmul.f32 %v551, %v623
      %v648 = vmul.f32 %v552, %v624
      %v649 = vmul.f32 %v553, %v625
      %v650 = vmul.f32 %v554, %v626
      %v651 = vmul.f32 %v555, %v627
      %v652 = vld [vmem:[%s3] sm:$0xff]
      %v653 = vld [vmem:[%s3 + $0x8] sm:$0xff]
      %v654 = vld [vmem:[%s3 + $0x10] sm:$0xff]
      %v655 = vld [vmem:[%s3 + $0x18] sm:$0xff]
      %v656 = vld [vmem:[%s3 + $0x20] sm:$0xff]
      %v657 = vld [vmem:[%s3 + $0x28] sm:$0xff]
      %v658 = vld [vmem:[%s3 + $0x30] sm:$0xff]
      %v659 = vld [vmem:[%s3 + $0x38] sm:$0xff]
      %v660 = vld [vmem:[%s3 + $0x40] sm:$0xff]
      %v661 = vld [vmem:[%s3 + $0x48] sm:$0xff]
      %v662 = vld [vmem:[%s3 + $0x50] sm:$0xff]
      %v663 = vld [vmem:[%s3 + $0x58] sm:$0xff]
      %v664 = vld [vmem:[%s3 + $0x60] sm:$0xff]
      %v665 = vld [vmem:[%s3 + $0x68] sm:$0xff]
      %v666 = vld [vmem:[%s3 + $0x70] sm:$0xff]
      %v667 = vld [vmem:[%s3 + $0x78] sm:$0xff]
      %v668 = vld [vmem:[%s3 + $0x80] sm:$0xff]
      %v669 = vld [vmem:[%s3 + $0x88] sm:$0xff]
      %v670 = vld [vmem:[%s3 + $0x90] sm:$0xff]
      %v671 = vld [vmem:[%s3 + $0x98] sm:$0xff]
      %v672 = vld [vmem:[%s3 + $0xa0] sm:$0xff]
      %v673 = vld [vmem:[%s3 + $0xa8] sm:$0xff]
      %v674 = vld [vmem:[%s3 + $0xb0] sm:$0xff]
      %v675 = vld [vmem:[%s3 + $0xb8] sm:$0xff]
      %v676 = vld [vmem:[%s3 + $0xc0] sm:$0xff]
      %v677 = vld [vmem:[%s3 + $0xc8] sm:$0xff]
      %v678 = vld [vmem:[%s3 + $0xd0] sm:$0xff]
      %v679 = vld [vmem:[%s3 + $0xd8] sm:$0xff]
      %v680 = vld [vmem:[%s3 + $0xe0] sm:$0xff]
      %v681 = vld [vmem:[%s3 + $0xe8] sm:$0xff]
      %v682 = vld [vmem:[%s3 + $0xf0] sm:$0xff]
      %v683 = vld [vmem:[%s3 + $0xf8] sm:$0xff]
      %v684 = vld [vmem:[%s3 + $0x100] sm:$0xff]
      %v685 = vld [vmem:[%s3 + $0x108] sm:$0xff]
      %v686 = vld [vmem:[%s3 + $0x110] sm:$0xff]
      %v687 = vld [vmem:[%s3 + $0x118] sm:$0xff]
      %v688 = vld [vmem:[%s3 + $0x120] sm:$0xff]
      %v689 = vld [vmem:[%s3 + $0x128] sm:$0xff]
      %v690 = vld [vmem:[%s3 + $0x130] sm:$0xff]
      %v691 = vld [vmem:[%s3 + $0x138] sm:$0xff]
      %v692 = vld [vmem:[%s3 + $0x140] sm:$0xff]
      %v693 = vld [vmem:[%s3 + $0x148] sm:$0xff]
      %v694 = vld [vmem:[%s3 + $0x150] sm:$0xff]
      %v695 = vld [vmem:[%s3 + $0x158] sm:$0xff]
      %v696 = vld [vmem:[%s3 + $0x160] sm:$0xff]
      %v697 = vld [vmem:[%s3 + $0x168] sm:$0xff]
      %v698 = vld [vmem:[%s3 + $0x170] sm:$0xff]
      %v699 = vld [vmem:[%s3 + $0x178] sm:$0xff]
      %v700 = vld [vmem:[%s4] sm:$0x1]
      %v702 = vlaneseq
      %v703 = vshrl.u32 %v702, 7
      %v704 = vsub.s32 0, %v703
      %v705 = vrot.slane %v700, %v704
      %707 = vmatprep.subr.mxu0 0.0
      %708 = vmatpush1.msra.mxu0 %v652
      %709 = vmatprep.subr.mxu0 0.0
      %710 = vmatpush1.msra.mxu0 %v653
      %711 = vmatprep.subr.mxu0 0.0
      %712 = vmatpush1.msra.mxu0 %v654
      %713 = vmatprep.subr.mxu0 0.0
      %714 = vmatpush1.msra.mxu0 %v655
      %715 = vmatprep.subr.mxu0 0.0
      %716 = vmatpush1.msra.mxu0 %v656
      %717 = vmatprep.subr.mxu0 0.0
      %718 = vmatpush1.msra.mxu0 %v657
      %719 = vmatprep.subr.mxu0 0.0
      %720 = vmatpush1.msra.mxu0 %v658
      %721 = vmatprep.subr.mxu0 0.0
      %722 = vmatpush1.msra.mxu0 %v659
      %723 = vmatprep.subr.mxu0 0.0
      %724 = vmatpush1.msra.mxu0 %v660
      %725 = vmatprep.subr.mxu0 0.0
      %726 = vmatpush1.msra.mxu0 %v661
      %727 = vmatprep.subr.mxu0 0.0
      %728 = vmatpush1.msra.mxu0 %v662
      %729 = vmatprep.subr.mxu0 0.0
      %730 = vmatpush1.msra.mxu0 %v663
      %731 = vmatprep.subr.mxu0 0.0
      %732 = vmatpush1.msra.mxu0 %v664
      %733 = vmatprep.subr.mxu0 0.0
      %734 = vmatpush1.msra.mxu0 %v665
      %735 = vmatprep.subr.mxu0 0.0
      %736 = vmatpush1.msra.mxu0 %v666
      %737 = vmatprep.subr.mxu0 0.0
      %738 = vmatpush1.msra.mxu0 %v667
      %739 = vmatprep.subr.mxu0 0.0
      %740 = vmatpush1.msra.mxu0 %v668
      %741 = vmatprep.subr.mxu0 0.0
      %742 = vmatpush1.msra.mxu0 %v669
      %743 = vmatprep.subr.mxu0 0.0
      %744 = vmatpush1.msra.mxu0 %v670
      %745 = vmatprep.subr.mxu0 0.0
      %746 = vmatpush1.msra.mxu0 %v671
      %747 = vmatprep.subr.mxu0 0.0
      %748 = vmatpush1.msra.mxu0 %v672
      %749 = vmatprep.subr.mxu0 0.0
      %750 = vmatpush1.msra.mxu0 %v673
      %751 = vmatprep.subr.mxu0 0.0
      %752 = vmatpush1.msra.mxu0 %v674
      %753 = vmatprep.subr.mxu0 0.0
      %754 = vmatpush1.msra.mxu0 %v675
      %755 = vmatprep.subr.mxu0 0.0
      %756 = vmatpush1.msra.mxu0 %v676
      %757 = vmatprep.subr.mxu0 0.0
      %758 = vmatpush1.msra.mxu0 %v677
      %759 = vmatprep.subr.mxu0 0.0
      %760 = vmatpush1.msra.mxu0 %v678
      %761 = vmatprep.subr.mxu0 0.0
      %762 = vmatpush1.msra.mxu0 %v679
      %763 = vmatprep.subr.mxu0 0.0
      %764 = vmatpush1.msra.mxu0 %v680
      %765 = vmatprep.subr.mxu0 0.0
      %766 = vmatpush1.msra.mxu0 %v681
      %767 = vmatprep.subr.mxu0 0.0
      %768 = vmatpush1.msra.mxu0 %v682
      %769 = vmatprep.subr.mxu0 0.0
      %770 = vmatpush1.msra.mxu0 %v683
      %771 = vmatprep.mubr.f32.mxu0 %v629
      %772 = vmatmul.mubr.f32.gmra.mrb[0].mxu0 %v628
      %v773 = vpop.f32.mrb[0].mxu0
      %v774 = vadd.f32 %v705, %v773
      %v775 = vpop.f32.mrb[0].mxu0
      %776 = vmatprep.mubr.f32.mxu0 %v632
      %777 = vmatmul.mubr.f32.gmra.mrb[0].mxu0 %v631
      %v778 = vpop.f32.mrb[0].mxu0
      %v779 = vadd.f32 %v705, %v778
      %v780 = vpop.f32.mrb[0].mxu0
      %781 = vmatprep.mubr.f32.mxu0 %v635
      %782 = vmatmul.mubr.f32.gmra.mrb[0].mxu0 %v634
      %v783 = vpop.f32.mrb[0].mxu0
      %v784 = vadd.f32 %v705, %v783
      %v785 = vpop.f32.mrb[0].mxu0
      %786 = vmatprep.mubr.f32.mxu0 %v638
      %787 = vmatmul.mubr.f32.gmra.mrb[0].mxu0 %v637
      %v788 = vpop.f32.mrb[0].mxu0
      %v789 = vadd.f32 %v705, %v788
      %v790 = vpop.f32.mrb[0].mxu0
      %791 = vmatprep.mubr.f32.mxu0 %v641
      %792 = vmatmul.mubr.f32.gmra.mrb[0].mxu0 %v640
      %v793 = vpop.f32.mrb[0].mxu0
      %v794 = vadd.f32 %v705, %v793
      %v795 = vpop.f32.mrb[0].mxu0
      %796 = vmatprep.mubr.f32.mxu0 %v644
      %797 = vmatmul.mubr.f32.gmra.mrb[0].mxu0 %v643
      %v798 = vpop.f32.mrb[0].mxu0
      %v799 = vadd.f32 %v705, %v798
      %v800 = vpop.f32.mrb[0].mxu0
      %801 = vmatprep.mubr.f32.mxu0 %v647
      %802 = vmatmul.mubr.f32.gmra.mrb[0].mxu0 %v646
      %v803 = vpop.f32.mrb[0].mxu0
      %v804 = vadd.f32 %v705, %v803
      %v805 = vpop.f32.mrb[0].mxu0
      %806 = vmatprep.mubr.f32.mxu0 %v650
      %807 = vmatmul.mubr.f32.gmra.mrb[0].mxu0 %v649
      %v808 = vpop.f32.mrb[0].mxu0
      %v809 = vadd.f32 %v705, %v808
      %v810 = vpop.f32.mrb[0].mxu0
      %811 = vdwg.mxu0
      %812 = vmatprep.subr.mxu0 0.0
      %813 = vmatpush1.msra.mxu0 %v684
      %814 = vmatprep.subr.mxu0 0.0
      %815 = vmatpush1.msra.mxu0 %v685
      %816 = vmatprep.subr.mxu0 0.0
      %817 = vmatpush1.msra.mxu0 %v686
      %818 = vmatprep.subr.mxu0 0.0
      %819 = vmatpush1.msra.mxu0 %v687
      %820 = vmatprep.subr.mxu0 0.0
      %821 = vmatpush1.msra.mxu0 %v688
      %822 = vmatprep.subr.mxu0 0.0
      %823 = vmatpush1.msra.mxu0 %v689
      %824 = vmatprep.subr.mxu0 0.0
      %825 = vmatpush1.msra.mxu0 %v690
      %826 = vmatprep.subr.mxu0 0.0
      %827 = vmatpush1.msra.mxu0 %v691
      %828 = vmatprep.subr.mxu0 0.0
      %829 = vmatpush1.msra.mxu0 %v692
      %830 = vmatprep.subr.mxu0 0.0
      %831 = vmatpush1.msra.mxu0 %v693
      %832 = vmatprep.subr.mxu0 0.0
      %833 = vmatpush1.msra.mxu0 %v694
      %834 = vmatprep.subr.mxu0 0.0
      %835 = vmatpush1.msra.mxu0 %v695
      %836 = vmatprep.subr.mxu0 0.0
      %837 = vmatpush1.msra.mxu0 %v696
      %838 = vmatprep.subr.mxu0 0.0
      %839 = vmatpush1.msra.mxu0 %v697
      %840 = vmatprep.subr.mxu0 0.0
      %841 = vmatpush1.msra.mxu0 %v698
      %842 = vmatprep.subr.mxu0 0.0
      %843 = vmatpush1.msra.mxu0 %v699
      %844 = vmatprep.subr.mxu0 0.0
      %845 = vmatpush1.msra.mxu0 0.0
      %846 = vmatprep.subr.mxu0 0.0
      %847 = vmatpush1.msra.mxu0 0.0
      %848 = vmatprep.subr.mxu0 0.0
      %849 = vmatpush1.msra.mxu0 0.0
      %850 = vmatprep.subr.mxu0 0.0
      %851 = vmatpush1.msra.mxu0 0.0
      %852 = vmatprep.subr.mxu0 0.0
      %853 = vmatpush1.msra.mxu0 0.0
      %854 = vmatprep.subr.mxu0 0.0
      %855 = vmatpush1.msra.mxu0 0.0
      %856 = vmatprep.subr.mxu0 0.0
      %857 = vmatpush1.msra.mxu0 0.0
      %858 = vmatprep.subr.mxu0 0.0
      %859 = vmatpush1.msra.mxu0 0.0
      %860 = vmatprep.subr.mxu0 0.0
      %861 = vmatpush1.msra.mxu0 0.0
      %862 = vmatprep.subr.mxu0 0.0
      %863 = vmatpush1.msra.mxu0 0.0
      %864 = vmatprep.subr.mxu0 0.0
      %865 = vmatpush1.msra.mxu0 0.0
      %866 = vmatprep.subr.mxu0 0.0
      %867 = vmatpush1.msra.mxu0 0.0
      %868 = vmatprep.subr.mxu0 0.0
      %869 = vmatpush1.msra.mxu0 0.0
      %870 = vmatprep.subr.mxu0 0.0
      %871 = vmatpush1.msra.mxu0 0.0
      %872 = vmatprep.subr.mxu0 0.0
      %873 = vmatpush1.msra.mxu0 0.0
      %874 = vmatprep.subr.mxu0 0.0
      %875 = vmatpush1.msra.mxu0 0.0
      %876 = vmatprep.mubr.f32.mxu0 0.0
      %877 = vmatmul.mubr.f32.gmra.mrb[0].mxu0 %v630
      %v878 = vpop.f32.mrb[0].mxu0
      %v879 = vadd.f32 %v774, %v878
      %v880 = vpop.f32.mrb[0].mxu0
      %881 = vmatprep.mubr.f32.mxu0 0.0
      %882 = vmatmul.mubr.f32.gmra.mrb[0].mxu0 %v633
      %v883 = vpop.f32.mrb[0].mxu0
      %v884 = vadd.f32 %v779, %v883
      %v885 = vpop.f32.mrb[0].mxu0
      %886 = vmatprep.mubr.f32.mxu0 0.0
      %887 = vmatmul.mubr.f32.gmra.mrb[0].mxu0 %v636
      %v888 = vpop.f32.mrb[0].mxu0
      %v889 = vadd.f32 %v784, %v888
      %v890 = vpop.f32.mrb[0].mxu0
      %891 = vmatprep.mubr.f32.mxu0 0.0
      %892 = vmatmul.mubr.f32.gmra.mrb[0].mxu0 %v639
      %v893 = vpop.f32.mrb[0].mxu0
      %v894 = vadd.f32 %v789, %v893
      %v895 = vpop.f32.mrb[0].mxu0
      %896 = vmatprep.mubr.f32.mxu0 0.0
      %897 = vmatmul.mubr.f32.gmra.mrb[0].mxu0 %v642
      %v898 = vpop.f32.mrb[0].mxu0
      %v899 = vadd.f32 %v794, %v898
      %v900 = vpop.f32.mrb[0].mxu0
      %901 = vmatprep.mubr.f32.mxu0 0.0
      %902 = vmatmul.mubr.f32.gmra.mrb[0].mxu0 %v645
      %v903 = vpop.f32.mrb[0].mxu0
      %v904 = vadd.f32 %v799, %v903
      %v905 = vpop.f32.mrb[0].mxu0
      %906 = vmatprep.mubr.f32.mxu0 0.0
      %907 = vmatmul.mubr.f32.gmra.mrb[0].mxu0 %v648
      %v908 = vpop.f32.mrb[0].mxu0
      %v909 = vadd.f32 %v804, %v908
      %v910 = vpop.f32.mrb[0].mxu0
      %911 = vmatprep.mubr.f32.mxu0 0.0
      %912 = vmatmul.mubr.f32.gmra.mrb[0].mxu0 %v651
      %v913 = vpop.f32.mrb[0].mxu0
      %v914 = vadd.f32 %v809, %v913
      %v915 = vpop.f32.mrb[0].mxu0
      %916 = vdwg.mxu0
      %917 = vst.msk [vmem:[%s226] sm:$0xff] %vm289, %v879
      %918 = vst.msk [vmem:[%s226 + $0x8] sm:$0xff] %vm289, %v884
      %919 = vst.msk [vmem:[%s226 + $0x10] sm:$0xff] %vm289, %v889
      %920 = vst.msk [vmem:[%s226 + $0x18] sm:$0xff] %vm289, %v894
      %921 = vst.msk [vmem:[%s226 + $0x20] sm:$0xff] %vm289, %v899
      %922 = vst.msk [vmem:[%s226 + $0x28] sm:$0xff] %vm289, %v904
      %923 = vst.msk [vmem:[%s226 + $0x30] sm:$0xff] %vm289, %v909
      %924 = vst.msk [vmem:[%s226 + $0x38] sm:$0xff] %vm289, %v914
      %s925 = smul.u32 8, %s16
      %p926 = scmp.lt.s32.totalorder %s925, 15
      %s927 = scalar_select %p926, %s925, 15
      %s928 = smul.addr %s927, 8
      %s929 = scalar_lea.vmem %s5, %s928
      // Predicated region
      $region41: #{tpu_custom_call.1} parent=39 // pred_check
        %p930 = pneg %p144
      $region42: #{tpu_custom_call.1} parent=39 // pred_check_branch
        %932 = sbr.rel (%p930) target = $region44
      $region43: #{tpu_custom_call.1} parent=39 // pred_region
        %s933 = smul.u32 8, %s16
      $region44: #{tpu_custom_call.1} parent=39 // pred_fallthru
        _
    $region40: #{tpu_custom_call.1} parent=5 // pred_fallthru
      _
    %p934 = scmp.le.s32.totalorder 2, %s11
    // Predicated region
    $region45: #{tpu_custom_call.1} parent=5 // pred_check
      %p935 = pneg %p934
    $region46: #{tpu_custom_call.1} parent=5 // pred_check_branch
      %937 = sbr.rel (%p935) target = $region48
    $region47: #{tpu_custom_call.1} parent=5 // pred_region
      %s938 = ssub.s32 %s11, 2
      // Predicated region
      $region49: #{tpu_custom_call.1} parent=47 // pred_check
        %p939 = pneg %p150
      $region50: #{tpu_custom_call.1} parent=47 // pred_check_branch
        %941 = sbr.rel (%p939) target = $region52
      $region51: #{tpu_custom_call.1} parent=47 // pred_region
        %s942 = smul.u32 8, %s17
        %p943 = scmp.lt.s32.totalorder %s942, 15
        %s944 = scalar_select %p943, %s942, 15
        %s945 = smul.addr %s944, 8
        %s946 = scalar_lea.vmem %s5, %s945
      $region52: #{tpu_custom_call.1} parent=47 // pred_fallthru
        _
    $region48: #{tpu_custom_call.1} parent=5 // pred_fallthru
      _
  $region6: #{tpu_custom_call.1} parent=0 // loop_footer
    %s15 = sadd.s32 1, %s11
  $region7: #{tpu_custom_call.1} parent=0 // loop_footer_branch
    %10 = sbr.rel target = $region3
  $region8: #{tpu_custom_call.1} parent=0 // loop_exit
    _

</llo_original>
